<compile_context>
chip_gen: v7x
topology: tpu7x:2x2x1
jax: 0.10.0
libtpu: 0.0.40
codegen_flags: <defaults>
</compile_context>

<pallas_src>
import functools
import math

import jax
import jax.numpy as jnp
from jax.experimental import pallas as pl


def _mha_kernel(q_ref, k_ref, v_ref,
                wq_ref, wk_ref, wv_ref, wo_ref,
                bq_ref, bk_ref, bv_ref, bo_ref,
                out_ref, attnw_ref=None,
                *, n_batch, len_q, len_kv, n_heads, d_head):
    """Single-invocation (grid=()) multi-head attention.

    q_ref: (N*L, E), k_ref/v_ref: (N*S, E)   -- batch folded into rows.
    w*_ref: pre-transposed (E, E) weights so x @ W.T == x @ w*_ref.
    out_ref: (N*L, E); attnw_ref: (N, L, S) head-averaged weights (optional).
    """
    embed = n_heads * d_head
    scale = 1.0 / math.sqrt(d_head)

    # ---- input projections: one MXU matmul each over all batch rows --------
    qp = jnp.dot(q_ref[...], wq_ref[...],
                 preferred_element_type=jnp.float32) + bq_ref[...]
    kp = jnp.dot(k_ref[...], wk_ref[...],
                 preferred_element_type=jnp.float32) + bk_ref[...]
    vp = jnp.dot(v_ref[...], wv_ref[...],
                 preferred_element_type=jnp.float32) + bv_ref[...]

    qp = qp * scale                       # fold 1/sqrt(d_head) into Q once

    # restore the batch axis (leading-dim split: layout-preserving reshape)
    qp3 = qp.reshape(n_batch, len_q, embed)
    kp3 = kp.reshape(n_batch, len_kv, embed)
    vp3 = vp.reshape(n_batch, len_kv, embed)

    wo = wo_ref[...]                      # (E, E), already transposed

    out_acc = jnp.zeros((n_batch * len_q, embed), jnp.float32)
    if attnw_ref is not None:
        w_acc = jnp.zeros((n_batch, len_q, len_kv), jnp.float32)

    # Static unroll over the (small) head count.  Scores and attention use
    # batch-batched einsums (every batch element in one dot_general); the
    # per-head slice of W_out^T is accumulated directly, fusing
    # "concat heads + out_proj" with no jnp.concatenate / relayout.
    for h in range(n_heads):
        lo, hi = h * d_head, (h + 1) * d_head
        qh = qp3[:, :, lo:hi]             # (N, L, HD)
        kh = kp3[:, :, lo:hi]             # (N, S, HD)
        vh = vp3[:, :, lo:hi]             # (N, S, HD)

        s = jnp.einsum('nld,nsd->nls', qh, kh,
                       preferred_element_type=jnp.float32)       # (N, L, S)
        s = s - jnp.max(s, axis=-1, keepdims=True)
        e = jnp.exp(s)
        # exact reciprocal keeps f32 parity with the PyTorch reference; switch
        # to approx=True (pure EUP) when precision of weights is not critical.
        p = e * pl.reciprocal(jnp.sum(e, axis=-1, keepdims=True), approx=False)
        if attnw_ref is not None:
            w_acc = w_acc + p

        oh = jnp.einsum('nls,nsd->nld', p, vh,
                        preferred_element_type=jnp.float32)       # (N, L, HD)
        out_acc = out_acc + jnp.dot(oh.reshape(n_batch * len_q, d_head),
                                    wo[lo:hi, :],
                                    preferred_element_type=jnp.float32)

    out_ref[...] = (out_acc + bo_ref[...]).astype(out_ref.dtype)
    if attnw_ref is not None:
        attnw_ref[...] = (w_acc * (1.0 / n_heads)).astype(attnw_ref.dtype)


@functools.partial(jax.jit, static_argnames=("num_heads", "need_weights"))
def multihead_attention(query, key, value, in_proj_weight, in_proj_bias,
                        out_proj_weight, out_proj_bias, num_heads,
                        need_weights=True):
    """query: (L, N, E), key/value: (S, N, E) -> (L, N, E), (N, L, S) | None."""
    L, N, E = query.shape
    S = key.shape[0]
    H = num_heads
    HD = E // H

    # Layout plumbing in plain XLA (outside the kernel): batch-major + rows
    # folded so the kernel sees matmul-ready 2-D slabs.
    q2 = jnp.transpose(query, (1, 0, 2)).reshape(N * L, E)
    k2 = jnp.transpose(key, (1, 0, 2)).reshape(N * S, E)
    v2 = jnp.transpose(value, (1, 0, 2)).reshape(N * S, E)

    # Pre-transpose / split the packed (3E, E) projection weight so the kernel
    # never transposes (x @ W.T == x @ W_t).
    wq_t = in_proj_weight[0:E, :].T
    wk_t = in_proj_weight[E:2 * E, :].T
    wv_t = in_proj_weight[2 * E:3 * E, :].T
    wo_t = out_proj_weight.T
    bq = in_proj_bias[0:E].reshape(1, E)
    bk = in_proj_bias[E:2 * E].reshape(1, E)
    bv = in_proj_bias[2 * E:3 * E].reshape(1, E)
    bo = out_proj_bias.reshape(1, E)

    kernel = functools.partial(_mha_kernel, n_batch=N, len_q=L, len_kv=S,
                               n_heads=H, d_head=HD)

    if need_weights:
        out_shape = (jax.ShapeDtypeStruct((N * L, E), query.dtype),
                     jax.ShapeDtypeStruct((N, L, S), query.dtype))
    else:
        out_shape = jax.ShapeDtypeStruct((N * L, E), query.dtype)

    # Single invocation, no grid / BlockSpec pipelining: the entire working
    # set (< 25 KB) lives in VMEM for the whole kernel.
    res = pl.pallas_call(kernel, out_shape=out_shape)(
        q2, k2, v2, wq_t, wk_t, wv_t, wo_t, bq, bk, bv, bo)

    if need_weights:
        out2d, attnw = res
    else:
        out2d, attnw = res, None

    attn_output = jnp.transpose(out2d.reshape(N, L, E), (1, 0, 2))  # (L, N, E)
    return attn_output, attnw


def reference_mha(query, key, value, w_in, b_in, w_out, b_out, num_heads):
    """Pure-JAX reference reproducing F.multi_head_attention_forward."""
    L, N, E = query.shape
    S = key.shape[0]
    H = num_heads
    HD = E // H
    wq, wk, wv = w_in[:E], w_in[E:2 * E], w_in[2 * E:]
    bq, bk, bv = b_in[:E], b_in[E:2 * E], b_in[2 * E:]
    q = jnp.einsum("lne,fe->lnf", query, wq) + bq
    k = jnp.einsum("sne,fe->snf", key, wk) + bk
    v = jnp.einsum("sne,fe->snf", value, wv) + bv
    q = q.reshape(L, N, H, HD).transpose(1, 2, 0, 3)   # (N, H, L, HD)
    k = k.reshape(S, N, H, HD).transpose(1, 2, 0, 3)
    v = v.reshape(S, N, H, HD).transpose(1, 2, 0, 3)
    s = jnp.einsum("nhld,nhsd->nhls", q, k) / math.sqrt(HD)
    p = jax.nn.softmax(s, axis=-1)
    o = jnp.einsum("nhls,nhsd->nhld", p, v)            # (N, H, L, HD)
    o = o.transpose(2, 0, 1, 3).reshape(L, N, E)
    out = jnp.einsum("lne,fe->lnf", o, w_out) + b_out
    return out, p.mean(axis=1)


if __name__ == "__main__":
    EMBED_DIM, NUM_HEADS = 32, 4
    SEQ_L = SEQ_S = 8
    BATCH = 2

    key0 = jax.random.PRNGKey(0)
    k1, k2, k3, k4, k5, k6 = jax.random.split(key0, 6)

    # deterministic parameters; biases are non-zero so the bias path is
    # actually exercised (PyTorch init zeroes them, forward must handle any).
    xb = math.sqrt(6.0 / (4 * EMBED_DIM))  # xavier_uniform on (3E, E)
    in_proj_weight = jax.random.uniform(
        k1, (3 * EMBED_DIM, EMBED_DIM), jnp.float32, -xb, xb)
    in_proj_bias = 0.02 * jax.random.normal(k6, (3 * EMBED_DIM,), jnp.float32)
    ob = 1.0 / math.sqrt(EMBED_DIM)
    out_proj_weight = jax.random.uniform(
        k2, (EMBED_DIM, EMBED_DIM), jnp.float32, -ob, ob)
    out_proj_bias = 0.02 * jnp.ones((EMBED_DIM,), jnp.float32)

    # inputs in (seq, batch, feature) layout (batch_first=False default)
    query = jax.random.normal(k3, (SEQ_L, BATCH, EMBED_DIM), jnp.float32)
    key_t = jax.random.normal(k4, (SEQ_S, BATCH, EMBED_DIM), jnp.float32)
    value = jax.random.normal(k5, (SEQ_S, BATCH, EMBED_DIM), jnp.float32)

    attn_out, attn_w = multihead_attention(
        query, key_t, value, in_proj_weight, in_proj_bias,
        out_proj_weight, out_proj_bias, num_heads=NUM_HEADS, need_weights=True)
    attn_out = jax.block_until_ready(attn_out)
    attn_w = jax.block_until_ready(attn_w)

    ref_out, ref_w = reference_mha(
        query, key_t, value, in_proj_weight, in_proj_bias,
        out_proj_weight, out_proj_bias, NUM_HEADS)

    assert attn_out.shape == (SEQ_L, BATCH, EMBED_DIM)
    assert attn_w.shape == (BATCH, SEQ_L, SEQ_S)
    assert jnp.allclose(attn_out, ref_out, atol=1e-4, rtol=1e-4)
    assert jnp.allclose(attn_w, ref_w, atol=1e-4, rtol=1e-4)

    # need_weights=False path: skips weight accumulation and the 2nd output.
    out_only, w_none = multihead_attention(
        query, key_t, value, in_proj_weight, in_proj_bias,
        out_proj_weight, out_proj_bias, num_heads=NUM_HEADS, need_weights=False)
    out_only = jax.block_until_ready(out_only)
    assert w_none is None
    assert jnp.allclose(out_only, ref_out, atol=1e-4, rtol=1e-4)

    # TODO(synk): dropout on attn weights, key_padding_mask / attn_mask /
    # is_causal, add_bias_kv, add_zero_attn and the kdim/vdim != embed_dim
    # branch are not exercised by the default configuration and are not
    # implemented here.
    print("KERNEL_OK")
</pallas_src>

<mosaic_0001>
module attributes {stable_mosaic.version = 11 : i64} {
  func.func @_mha_kernel(%arg0: memref<16x32xf32, #tpu.memory_space<vmem>>, %arg1: memref<16x32xf32, #tpu.memory_space<vmem>>, %arg2: memref<16x32xf32, #tpu.memory_space<vmem>>, %arg3: memref<32x32xf32, #tpu.memory_space<vmem>>, %arg4: memref<32x32xf32, #tpu.memory_space<vmem>>, %arg5: memref<32x32xf32, #tpu.memory_space<vmem>>, %arg6: memref<32x32xf32, #tpu.memory_space<vmem>>, %arg7: memref<1x32xf32, #tpu.memory_space<vmem>>, %arg8: memref<1x32xf32, #tpu.memory_space<vmem>>, %arg9: memref<1x32xf32, #tpu.memory_space<vmem>>, %arg10: memref<1x32xf32, #tpu.memory_space<vmem>>, %arg11: memref<16x32xf32, #tpu.memory_space<vmem>>, %arg12: memref<2x8x8xf32, #tpu.memory_space<vmem>>) attributes {dimension_semantics = [], scalar_prefetch = 0 : i64, scratch_operands = 0 : i64, tpu.core_type = #tpu.core_type<tc>} {
    %c0 = arith.constant 0 : index
    %c0_0 = arith.constant 0 : index
    %0 = vector.load %arg0[%c0, %c0_0] : memref<16x32xf32, #tpu.memory_space<vmem>>, vector<16x32xf32>
    %c0_1 = arith.constant 0 : index
    %c0_2 = arith.constant 0 : index
    %1 = vector.load %arg3[%c0_1, %c0_2] : memref<32x32xf32, #tpu.memory_space<vmem>>, vector<32x32xf32>
    %cst = arith.constant dense<0.000000e+00> : vector<16x32xf32>
    %2 = tpu.matmul %0, %1, %cst {dimension_numbers = #tpu.dot_dimension_numbers<[1], [0], [0], [1], [0, 0, 1, 1], [], []>} : vector<16x32xf32>, vector<32x32xf32>, vector<16x32xf32> -> vector<16x32xf32>
    %c0_3 = arith.constant 0 : index
    %c0_4 = arith.constant 0 : index
    %3 = vector.load %arg7[%c0_3, %c0_4] : memref<1x32xf32, #tpu.memory_space<vmem>>, vector<1x32xf32>
    %4 = vector.broadcast %3 : vector<1x32xf32> to vector<16x32xf32>
    %5 = arith.addf %2, %4 : vector<16x32xf32>
    %c0_5 = arith.constant 0 : index
    %c0_6 = arith.constant 0 : index
    %6 = vector.load %arg1[%c0_5, %c0_6] : memref<16x32xf32, #tpu.memory_space<vmem>>, vector<16x32xf32>
    %c0_7 = arith.constant 0 : index
    %c0_8 = arith.constant 0 : index
    %7 = vector.load %arg4[%c0_7, %c0_8] : memref<32x32xf32, #tpu.memory_space<vmem>>, vector<32x32xf32>
    %cst_9 = arith.constant dense<0.000000e+00> : vector<16x32xf32>
    %8 = tpu.matmul %6, %7, %cst_9 {dimension_numbers = #tpu.dot_dimension_numbers<[1], [0], [0], [1], [0, 0, 1, 1], [], []>} : vector<16x32xf32>, vector<32x32xf32>, vector<16x32xf32> -> vector<16x32xf32>
    %c0_10 = arith.constant 0 : index
    %c0_11 = arith.constant 0 : index
    %9 = vector.load %arg8[%c0_10, %c0_11] : memref<1x32xf32, #tpu.memory_space<vmem>>, vector<1x32xf32>
    %10 = vector.broadcast %9 : vector<1x32xf32> to vector<16x32xf32>
    %11 = arith.addf %8, %10 : vector<16x32xf32>
    %c0_12 = arith.constant 0 : index
    %c0_13 = arith.constant 0 : index
    %12 = vector.load %arg2[%c0_12, %c0_13] : memref<16x32xf32, #tpu.memory_space<vmem>>, vector<16x32xf32>
    %c0_14 = arith.constant 0 : index
    %c0_15 = arith.constant 0 : index
    %13 = vector.load %arg5[%c0_14, %c0_15] : memref<32x32xf32, #tpu.memory_space<vmem>>, vector<32x32xf32>
    %cst_16 = arith.constant dense<0.000000e+00> : vector<16x32xf32>
    %14 = tpu.matmul %12, %13, %cst_16 {dimension_numbers = #tpu.dot_dimension_numbers<[1], [0], [0], [1], [0, 0, 1, 1], [], []>} : vector<16x32xf32>, vector<32x32xf32>, vector<16x32xf32> -> vector<16x32xf32>
    %c0_17 = arith.constant 0 : index
    %c0_18 = arith.constant 0 : index
    %15 = vector.load %arg9[%c0_17, %c0_18] : memref<1x32xf32, #tpu.memory_space<vmem>>, vector<1x32xf32>
    %16 = vector.broadcast %15 : vector<1x32xf32> to vector<16x32xf32>
    %17 = arith.addf %14, %16 : vector<16x32xf32>
    %cst_19 = arith.constant 0.353553385 : f32
    %18 = vector.broadcast %cst_19 : f32 to vector<16x32xf32>
    %19 = arith.mulf %5, %18 : vector<16x32xf32>
    %20 = vector.shape_cast %19 : vector<16x32xf32> to vector<2x8x32xf32>
    %21 = vector.shape_cast %11 : vector<16x32xf32> to vector<2x8x32xf32>
    %22 = vector.shape_cast %17 : vector<16x32xf32> to vector<2x8x32xf32>
    %c0_20 = arith.constant 0 : index
    %c0_21 = arith.constant 0 : index
    %23 = vector.load %arg6[%c0_20, %c0_21] : memref<32x32xf32, #tpu.memory_space<vmem>>, vector<32x32xf32>
    %cst_22 = arith.constant 0.000000e+00 : f32
    %24 = vector.broadcast %cst_22 : f32 to vector<16x32xf32>
    %cst_23 = arith.constant 0.000000e+00 : f32
    %25 = vector.broadcast %cst_23 : f32 to vector<2x8x8xf32>
    %26 = vector.extract_strided_slice %20 {offsets = [0, 0, 0], sizes = [2, 8, 8], strides = [1, 1, 1]} : vector<2x8x32xf32> to vector<2x8x8xf32>
    %27 = vector.extract_strided_slice %21 {offsets = [0, 0, 0], sizes = [2, 8, 8], strides = [1, 1, 1]} : vector<2x8x32xf32> to vector<2x8x8xf32>
    %28 = vector.extract_strided_slice %22 {offsets = [0, 0, 0], sizes = [2, 8, 8], strides = [1, 1, 1]} : vector<2x8x32xf32> to vector<2x8x8xf32>
    "tpu.trace_start"() <{level = 10 : i32, message = "nld,nsd->nls"}> : () -> ()
    %cst_24 = arith.constant dense<0.000000e+00> : vector<2x8x8xf32>
    %29 = tpu.matmul %26, %27, %cst_24 {dimension_numbers = #tpu.dot_dimension_numbers<[2], [2], [1], [1], [0, 0, 0, 1, 1, 1], [0], [0]>} : vector<2x8x8xf32>, vector<2x8x8xf32>, vector<2x8x8xf32> -> vector<2x8x8xf32>
    "tpu.trace_stop"() : () -> ()
    %cst_25 = arith.constant dense<0xFF800000> : vector<2x8xf32>
    %30 = vector.multi_reduction <maximumf>, %29, %cst_25 [2] : vector<2x8x8xf32> to vector<2x8xf32>
    %31 = vector.shape_cast %30 : vector<2x8xf32> to vector<2x8x1xf32>
    %32 = vector.broadcast %31 : vector<2x8x1xf32> to vector<2x8x8xf32>
    %33 = arith.subf %29, %32 : vector<2x8x8xf32>
    %34 = math.exp %33 : vector<2x8x8xf32>
    %cst_26 = arith.constant dense<0.000000e+00> : vector<2x8xf32>
    %35 = vector.multi_reduction <add>, %34, %cst_26 [2] : vector<2x8x8xf32> to vector<2x8xf32>
    %36 = vector.shape_cast %35 : vector<2x8xf32> to vector<2x8x1xf32>
    %37 = tpu.reciprocal %36 : vector<2x8x1xf32> -> vector<2x8x1xf32>
    %38 = vector.broadcast %37 : vector<2x8x1xf32> to vector<2x8x8xf32>
    %39 = arith.mulf %34, %38 : vector<2x8x8xf32>
    %40 = arith.addf %25, %39 : vector<2x8x8xf32>
    "tpu.trace_start"() <{level = 10 : i32, message = "nls,nsd->nld"}> : () -> ()
    %cst_27 = arith.constant dense<0.000000e+00> : vector<2x8x8xf32>
    %41 = tpu.matmul %39, %28, %cst_27 {dimension_numbers = #tpu.dot_dimension_numbers<[2], [1], [1], [2], [0, 0, 0, 1, 1, 2], [0], [0]>} : vector<2x8x8xf32>, vector<2x8x8xf32>, vector<2x8x8xf32> -> vector<2x8x8xf32>
    "tpu.trace_stop"() : () -> ()
    %42 = vector.shape_cast %41 : vector<2x8x8xf32> to vector<16x8xf32>
    %43 = vector.extract_strided_slice %23 {offsets = [0, 0], sizes = [8, 32], strides = [1, 1]} : vector<32x32xf32> to vector<8x32xf32>
    %cst_28 = arith.constant dense<0.000000e+00> : vector<16x32xf32>
    %44 = tpu.matmul %42, %43, %cst_28 {dimension_numbers = #tpu.dot_dimension_numbers<[1], [0], [0], [1], [0, 0, 1, 1], [], []>} : vector<16x8xf32>, vector<8x32xf32>, vector<16x32xf32> -> vector<16x32xf32>
    %45 = arith.addf %24, %44 : vector<16x32xf32>
    %46 = vector.extract_strided_slice %20 {offsets = [0, 0, 8], sizes = [2, 8, 8], strides = [1, 1, 1]} : vector<2x8x32xf32> to vector<2x8x8xf32>
    %47 = vector.extract_strided_slice %21 {offsets = [0, 0, 8], sizes = [2, 8, 8], strides = [1, 1, 1]} : vector<2x8x32xf32> to vector<2x8x8xf32>
    %48 = vector.extract_strided_slice %22 {offsets = [0, 0, 8], sizes = [2, 8, 8], strides = [1, 1, 1]} : vector<2x8x32xf32> to vector<2x8x8xf32>
    "tpu.trace_start"() <{level = 10 : i32, message = "nld,nsd->nls"}> : () -> ()
    %cst_29 = arith.constant dense<0.000000e+00> : vector<2x8x8xf32>
    %49 = tpu.matmul %46, %47, %cst_29 {dimension_numbers = #tpu.dot_dimension_numbers<[2], [2], [1], [1], [0, 0, 0, 1, 1, 1], [0], [0]>} : vector<2x8x8xf32>, vector<2x8x8xf32>, vector<2x8x8xf32> -> vector<2x8x8xf32>
    "tpu.trace_stop"() : () -> ()
    %cst_30 = arith.constant dense<0xFF800000> : vector<2x8xf32>
    %50 = vector.multi_reduction <maximumf>, %49, %cst_30 [2] : vector<2x8x8xf32> to vector<2x8xf32>
    %51 = vector.shape_cast %50 : vector<2x8xf32> to vector<2x8x1xf32>
    %52 = vector.broadcast %51 : vector<2x8x1xf32> to vector<2x8x8xf32>
    %53 = arith.subf %49, %52 : vector<2x8x8xf32>
    %54 = math.exp %53 : vector<2x8x8xf32>
    %cst_31 = arith.constant dense<0.000000e+00> : vector<2x8xf32>
    %55 = vector.multi_reduction <add>, %54, %cst_31 [2] : vector<2x8x8xf32> to vector<2x8xf32>
    %56 = vector.shape_cast %55 : vector<2x8xf32> to vector<2x8x1xf32>
    %57 = tpu.reciprocal %56 : vector<2x8x1xf32> -> vector<2x8x1xf32>
    %58 = vector.broadcast %57 : vector<2x8x1xf32> to vector<2x8x8xf32>
    %59 = arith.mulf %54, %58 : vector<2x8x8xf32>
    %60 = arith.addf %40, %59 : vector<2x8x8xf32>
    "tpu.trace_start"() <{level = 10 : i32, message = "nls,nsd->nld"}> : () -> ()
    %cst_32 = arith.constant dense<0.000000e+00> : vector<2x8x8xf32>
    %61 = tpu.matmul %59, %48, %cst_32 {dimension_numbers = #tpu.dot_dimension_numbers<[2], [1], [1], [2], [0, 0, 0, 1, 1, 2], [0], [0]>} : vector<2x8x8xf32>, vector<2x8x8xf32>, vector<2x8x8xf32> -> vector<2x8x8xf32>
    "tpu.trace_stop"() : () -> ()
    %62 = vector.shape_cast %61 : vector<2x8x8xf32> to vector<16x8xf32>
    %63 = vector.extract_strided_slice %23 {offsets = [8, 0], sizes = [8, 32], strides = [1, 1]} : vector<32x32xf32> to vector<8x32xf32>
    %cst_33 = arith.constant dense<0.000000e+00> : vector<16x32xf32>
    %64 = tpu.matmul %62, %63, %cst_33 {dimension_numbers = #tpu.dot_dimension_numbers<[1], [0], [0], [1], [0, 0, 1, 1], [], []>} : vector<16x8xf32>, vector<8x32xf32>, vector<16x32xf32> -> vector<16x32xf32>
    %65 = arith.addf %45, %64 : vector<16x32xf32>
    %66 = vector.extract_strided_slice %20 {offsets = [0, 0, 16], sizes = [2, 8, 8], strides = [1, 1, 1]} : vector<2x8x32xf32> to vector<2x8x8xf32>
    %67 = vector.extract_strided_slice %21 {offsets = [0, 0, 16], sizes = [2, 8, 8], strides = [1, 1, 1]} : vector<2x8x32xf32> to vector<2x8x8xf32>
    %68 = vector.extract_strided_slice %22 {offsets = [0, 0, 16], sizes = [2, 8, 8], strides = [1, 1, 1]} : vector<2x8x32xf32> to vector<2x8x8xf32>
    "tpu.trace_start"() <{level = 10 : i32, message = "nld,nsd->nls"}> : () -> ()
    %cst_34 = arith.constant dense<0.000000e+00> : vector<2x8x8xf32>
    %69 = tpu.matmul %66, %67, %cst_34 {dimension_numbers = #tpu.dot_dimension_numbers<[2], [2], [1], [1], [0, 0, 0, 1, 1, 1], [0], [0]>} : vector<2x8x8xf32>, vector<2x8x8xf32>, vector<2x8x8xf32> -> vector<2x8x8xf32>
    "tpu.trace_stop"() : () -> ()
    %cst_35 = arith.constant dense<0xFF800000> : vector<2x8xf32>
    %70 = vector.multi_reduction <maximumf>, %69, %cst_35 [2] : vector<2x8x8xf32> to vector<2x8xf32>
    %71 = vector.shape_cast %70 : vector<2x8xf32> to vector<2x8x1xf32>
    %72 = vector.broadcast %71 : vector<2x8x1xf32> to vector<2x8x8xf32>
    %73 = arith.subf %69, %72 : vector<2x8x8xf32>
    %74 = math.exp %73 : vector<2x8x8xf32>
    %cst_36 = arith.constant dense<0.000000e+00> : vector<2x8xf32>
    %75 = vector.multi_reduction <add>, %74, %cst_36 [2] : vector<2x8x8xf32> to vector<2x8xf32>
    %76 = vector.shape_cast %75 : vector<2x8xf32> to vector<2x8x1xf32>
    %77 = tpu.reciprocal %76 : vector<2x8x1xf32> -> vector<2x8x1xf32>
    %78 = vector.broadcast %77 : vector<2x8x1xf32> to vector<2x8x8xf32>
    %79 = arith.mulf %74, %78 : vector<2x8x8xf32>
    %80 = arith.addf %60, %79 : vector<2x8x8xf32>
    "tpu.trace_start"() <{level = 10 : i32, message = "nls,nsd->nld"}> : () -> ()
    %cst_37 = arith.constant dense<0.000000e+00> : vector<2x8x8xf32>
    %81 = tpu.matmul %79, %68, %cst_37 {dimension_numbers = #tpu.dot_dimension_numbers<[2], [1], [1], [2], [0, 0, 0, 1, 1, 2], [0], [0]>} : vector<2x8x8xf32>, vector<2x8x8xf32>, vector<2x8x8xf32> -> vector<2x8x8xf32>
    "tpu.trace_stop"() : () -> ()
    %82 = vector.shape_cast %81 : vector<2x8x8xf32> to vector<16x8xf32>
    %83 = vector.extract_strided_slice %23 {offsets = [16, 0], sizes = [8, 32], strides = [1, 1]} : vector<32x32xf32> to vector<8x32xf32>
    %cst_38 = arith.constant dense<0.000000e+00> : vector<16x32xf32>
    %84 = tpu.matmul %82, %83, %cst_38 {dimension_numbers = #tpu.dot_dimension_numbers<[1], [0], [0], [1], [0, 0, 1, 1], [], []>} : vector<16x8xf32>, vector<8x32xf32>, vector<16x32xf32> -> vector<16x32xf32>
    %85 = arith.addf %65, %84 : vector<16x32xf32>
    %86 = vector.extract_strided_slice %20 {offsets = [0, 0, 24], sizes = [2, 8, 8], strides = [1, 1, 1]} : vector<2x8x32xf32> to vector<2x8x8xf32>
    %87 = vector.extract_strided_slice %21 {offsets = [0, 0, 24], sizes = [2, 8, 8], strides = [1, 1, 1]} : vector<2x8x32xf32> to vector<2x8x8xf32>
    %88 = vector.extract_strided_slice %22 {offsets = [0, 0, 24], sizes = [2, 8, 8], strides = [1, 1, 1]} : vector<2x8x32xf32> to vector<2x8x8xf32>
    "tpu.trace_start"() <{level = 10 : i32, message = "nld,nsd->nls"}> : () -> ()
    %cst_39 = arith.constant dense<0.000000e+00> : vector<2x8x8xf32>
    %89 = tpu.matmul %86, %87, %cst_39 {dimension_numbers = #tpu.dot_dimension_numbers<[2], [2], [1], [1], [0, 0, 0, 1, 1, 1], [0], [0]>} : vector<2x8x8xf32>, vector<2x8x8xf32>, vector<2x8x8xf32> -> vector<2x8x8xf32>
    "tpu.trace_stop"() : () -> ()
    %cst_40 = arith.constant dense<0xFF800000> : vector<2x8xf32>
    %90 = vector.multi_reduction <maximumf>, %89, %cst_40 [2] : vector<2x8x8xf32> to vector<2x8xf32>
    %91 = vector.shape_cast %90 : vector<2x8xf32> to vector<2x8x1xf32>
    %92 = vector.broadcast %91 : vector<2x8x1xf32> to vector<2x8x8xf32>
    %93 = arith.subf %89, %92 : vector<2x8x8xf32>
    %94 = math.exp %93 : vector<2x8x8xf32>
    %cst_41 = arith.constant dense<0.000000e+00> : vector<2x8xf32>
    %95 = vector.multi_reduction <add>, %94, %cst_41 [2] : vector<2x8x8xf32> to vector<2x8xf32>
    %96 = vector.shape_cast %95 : vector<2x8xf32> to vector<2x8x1xf32>
    %97 = tpu.reciprocal %96 : vector<2x8x1xf32> -> vector<2x8x1xf32>
    %98 = vector.broadcast %97 : vector<2x8x1xf32> to vector<2x8x8xf32>
    %99 = arith.mulf %94, %98 : vector<2x8x8xf32>
    %100 = arith.addf %80, %99 : vector<2x8x8xf32>
    "tpu.trace_start"() <{level = 10 : i32, message = "nls,nsd->nld"}> : () -> ()
    %cst_42 = arith.constant dense<0.000000e+00> : vector<2x8x8xf32>
    %101 = tpu.matmul %99, %88, %cst_42 {dimension_numbers = #tpu.dot_dimension_numbers<[2], [1], [1], [2], [0, 0, 0, 1, 1, 2], [0], [0]>} : vector<2x8x8xf32>, vector<2x8x8xf32>, vector<2x8x8xf32> -> vector<2x8x8xf32>
    "tpu.trace_stop"() : () -> ()
    %102 = vector.shape_cast %101 : vector<2x8x8xf32> to vector<16x8xf32>
    %103 = vector.extract_strided_slice %23 {offsets = [24, 0], sizes = [8, 32], strides = [1, 1]} : vector<32x32xf32> to vector<8x32xf32>
    %cst_43 = arith.constant dense<0.000000e+00> : vector<16x32xf32>
    %104 = tpu.matmul %102, %103, %cst_43 {dimension_numbers = #tpu.dot_dimension_numbers<[1], [0], [0], [1], [0, 0, 1, 1], [], []>} : vector<16x8xf32>, vector<8x32xf32>, vector<16x32xf32> -> vector<16x32xf32>
    %105 = arith.addf %85, %104 : vector<16x32xf32>
    %c0_44 = arith.constant 0 : index
    %c0_45 = arith.constant 0 : index
    %106 = vector.load %arg10[%c0_44, %c0_45] : memref<1x32xf32, #tpu.memory_space<vmem>>, vector<1x32xf32>
    %107 = vector.broadcast %106 : vector<1x32xf32> to vector<16x32xf32>
    %108 = arith.addf %105, %107 : vector<16x32xf32>
    %c0_46 = arith.constant 0 : index
    %c0_47 = arith.constant 0 : index
    %109 = vector.load %arg11[%c0_46, %c0_47] : memref<16x32xf32, #tpu.memory_space<vmem>>, vector<16x32xf32>
    tpu.vector_store %arg11[%c0_46, %c0_47], %108 {strides = array<i32>} : memref<16x32xf32, #tpu.memory_space<vmem>>, vector<16x32xf32>,
    %cst_48 = arith.constant 2.500000e-01 : f32
    %110 = vector.broadcast %cst_48 : f32 to vector<2x8x8xf32>
    %111 = arith.mulf %100, %110 : vector<2x8x8xf32>
    %c0_49 = arith.constant 0 : index
    %c0_50 = arith.constant 0 : index
    %c0_51 = arith.constant 0 : index
    %112 = vector.load %arg12[%c0_49, %c0_50, %c0_51] : memref<2x8x8xf32, #tpu.memory_space<vmem>>, vector<2x8x8xf32>
    tpu.vector_store %arg12[%c0_49, %c0_50, %c0_51], %111 {strides = array<i32>} : memref<2x8x8xf32, #tpu.memory_space<vmem>>, vector<2x8x8xf32>,
    return
  }
}

</mosaic_0001>

<llo_original>
// kernel: multihead_attention.1
$region0: #{multihead_attention.1}
  #allocation0 [shape = 'u32[]', space=smem, size = 0x4, offset = 0x4, fixed_abs, tag = 'smem constant byte address 0x4 - core index']
  #allocation1 [shape = 'u32[144,128]{1,0:T(1,128)}', space=vmem, size = 0x12000, scoped, tag = 'internal scratch']
  %s0 = inlined_call_operand.vmem [shape: f32[16,32], index: 0, kind: input, shape index: {}]
  %s1 = inlined_call_operand.vmem [shape: f32[16,32], index: 1, kind: input, shape index: {}]
  %s2 = inlined_call_operand.vmem [shape: f32[16,32], index: 2, kind: input, shape index: {}]
  %s3 = inlined_call_operand.vmem [shape: f32[32,32], index: 3, kind: input, shape index: {}]
  %s4 = inlined_call_operand.vmem [shape: f32[32,32], index: 4, kind: input, shape index: {}]
  %s5 = inlined_call_operand.vmem [shape: f32[32,32], index: 5, kind: input, shape index: {}]
  %s6 = inlined_call_operand.vmem [shape: f32[32,32], index: 6, kind: input, shape index: {}]
  %s7 = inlined_call_operand.vmem [shape: f32[1,32], index: 7, kind: input, shape index: {}]
  %s8 = inlined_call_operand.vmem [shape: f32[1,32], index: 8, kind: input, shape index: {}]
  %s9 = inlined_call_operand.vmem [shape: f32[1,32], index: 9, kind: input, shape index: {}]
  %s10 = inlined_call_operand.vmem [shape: f32[1,32], index: 10, kind: input, shape index: {}]
  %s11 = inlined_call_operand.vmem [shape: f32[16,32], index: 11, kind: output, shape index: {0}]
  %s12 = inlined_call_operand.hbm [shape: f32[2,8,8], index: 12, kind: output, shape index: {1}]
  %13 = xla_tuple %s11, %s12
  %s14 = sld [smem:[#allocation0]]
  $region62: #{multihead_attention.1} parent=0
    _
  %s16 = ssub.s32 1, %s14
  %s17 = scalar_select 0, %s16, %s14
  $region1: #{multihead_attention.1} parent=0
    #allocation2 [shape = 'u8[8192]{0}', space=vmem, size = 0x2000, scoped, tag = 'output window, operand 1, single buffered']
    #allocation3 [shape = 's32[1]{0}', space=sflag, size = 0x4, scoped, tag = 'scoped memory for multihead_attention.1']
    %18 = vsyncpa [#allocation3], 0
    // Predicated region
    $region2: #{multihead_attention.1} parent=1 // pred_check
      _
    $region3: #{multihead_attention.1} parent=1 // pred_check_branch
      %20 = sbr.rel (0) target = $region5
    $region4: #{multihead_attention.1} parent=1 // pred_region
      _
    $region5: #{multihead_attention.1} parent=1 // pred_fallthru
      _
    // Predicated region
    $region6: #{multihead_attention.1} parent=1 // pred_check
      _
    $region7: #{multihead_attention.1} parent=1 // pred_check_branch
      %22 = sbr.rel (0) target = $region9
    $region8: #{multihead_attention.1} parent=1 // pred_region
      _
    $region9: #{multihead_attention.1} parent=1 // pred_fallthru
      _
    // Predicated region
    $region10: #{multihead_attention.1} parent=1 // pred_check
      _
    $region11: #{multihead_attention.1} parent=1 // pred_check_branch
      %24 = sbr.rel (0) target = $region13
    $region12: #{multihead_attention.1} parent=1 // pred_region
      _
    $region13: #{multihead_attention.1} parent=1 // pred_fallthru
      _
    // Predicated region
    $region14: #{multihead_attention.1} parent=1 // pred_check
      _
    $region15: #{multihead_attention.1} parent=1 // pred_check_branch
      %26 = sbr.rel (0) target = $region17
    $region16: #{multihead_attention.1} parent=1 // pred_region
      _
    $region17: #{multihead_attention.1} parent=1 // pred_fallthru
      _
    // Predicated region
    $region18: #{multihead_attention.1} parent=1 // pred_check
      _
    $region19: #{multihead_attention.1} parent=1 // pred_check_branch
      %28 = sbr.rel (0) target = $region21
    $region20: #{multihead_attention.1} parent=1 // pred_region
      _
    $region21: #{multihead_attention.1} parent=1 // pred_fallthru
      _
    // Predicated region
    $region22: #{multihead_attention.1} parent=1 // pred_check
      _
    $region23: #{multihead_attention.1} parent=1 // pred_check_branch
      %30 = sbr.rel (0) target = $region25
    $region24: #{multihead_attention.1} parent=1 // pred_region
      _
    $region25: #{multihead_attention.1} parent=1 // pred_fallthru
      _
    // Predicated region
    $region26: #{multihead_attention.1} parent=1 // pred_check
      _
    $region27: #{multihead_attention.1} parent=1 // pred_check_branch
      %32 = sbr.rel (0) target = $region29
    $region28: #{multihead_attention.1} parent=1 // pred_region
      _
    $region29: #{multihead_attention.1} parent=1 // pred_fallthru
      _
    // Predicated region
    $region30: #{multihead_attention.1} parent=1 // pred_check
      _
    $region31: #{multihead_attention.1} parent=1 // pred_check_branch
      %34 = sbr.rel (0) target = $region33
    $region32: #{multihead_attention.1} parent=1 // pred_region
      _
    $region33: #{multihead_attention.1} parent=1 // pred_fallthru
      _
    // Predicated region
    $region34: #{multihead_attention.1} parent=1 // pred_check
      _
    $region35: #{multihead_attention.1} parent=1 // pred_check_branch
      %36 = sbr.rel (0) target = $region37
    $region36: #{multihead_attention.1} parent=1 // pred_region
      _
    $region37: #{multihead_attention.1} parent=1 // pred_fallthru
      _
    // Predicated region
    $region38: #{multihead_attention.1} parent=1 // pred_check
      _
    $region39: #{multihead_attention.1} parent=1 // pred_check_branch
      %38 = sbr.rel (0) target = $region41
    $region40: #{multihead_attention.1} parent=1 // pred_region
      _
    $region41: #{multihead_attention.1} parent=1 // pred_fallthru
      _
    // Predicated region
    $region42: #{multihead_attention.1} parent=1 // pred_check
      _
    $region43: #{multihead_attention.1} parent=1 // pred_check_branch
      %40 = sbr.rel (0) target = $region45
    $region44: #{multihead_attention.1} parent=1 // pred_region
      _
    $region45: #{multihead_attention.1} parent=1 // pred_fallthru
      _
    %v41 = vld [vmem:[%s0] sm:$0xff]
    %v42 = vld [vmem:[%s0 + $0x8] sm:$0xff]
    %v43 = vld [vmem:[%s3] sm:$0xff]
    %v44 = vld [vmem:[%s3 + $0x8] sm:$0xff]
    %v45 = vld [vmem:[%s3 + $0x10] sm:$0xff]
    %v46 = vld [vmem:[%s3 + $0x18] sm:$0xff]
    %v47 = vld [vmem:[%s7] sm:$0x1]
    %v49 = vlaneseq
    %v50 = vshrl.u32 %v49, 7
    %v51 = vsub.s32 0, %v50
    %v52 = vrot.slane %v47, %v51
    %vm54 = vcmask 261120
    %v56 = vsel %vm54, %v41, 0
    %v59 = vsel %vm54, %v42, 0
    %61 = vmatprep.subr.mxu0 0.0
    %62 = vmatpush1.msra.mxu0 %v43
    %63 = vmatprep.subr.mxu0 0.0
    %64 = vmatpush1.msra.mxu0 %v44
    %65 = vmatprep.subr.mxu0 0.0
    %66 = vmatpush1.msra.mxu0 %v45
    %67 = vmatprep.subr.mxu0 0.0
    %68 = vmatpush1.msra.mxu0 %v46
    %69 = vmatprep.subr.mxu0 0.0
    %70 = vmatpush1.msra.mxu0 0.0
    %71 = vmatprep.subr.mxu0 0.0
    %72 = vmatpush1.msra.mxu0 0.0
    %73 = vmatprep.subr.mxu0 0.0
    %74 = vmatpush1.msra.mxu0 0.0
    %75 = vmatprep.subr.mxu0 0.0
    %76 = vmatpush1.msra.mxu0 0.0
    %77 = vmatprep.subr.mxu0 0.0
    %78 = vmatpush1.msra.mxu0 0.0
    %79 = vmatprep.subr.mxu0 0.0
    %80 = vmatpush1.msra.mxu0 0.0
    %81 = vmatprep.subr.mxu0 0.0
    %82 = vmatpush1.msra.mxu0 0.0
    %83 = vmatprep.subr.mxu0 0.0
    %84 = vmatpush1.msra.mxu0 0.0
    %85 = vmatprep.subr.mxu0 0.0
    %86 = vmatpush1.msra.mxu0 0.0
    %87 = vmatprep.subr.mxu0 0.0
    %88 = vmatpush1.msra.mxu0 0.0
    %89 = vmatprep.subr.mxu0 0.0
    %90 = vmatpush1.msra.mxu0 0.0
    %91 = vmatprep.subr.mxu0 0.0
    %92 = vmatpush1.msra.mxu0 0.0
    %93 = vmatprep.subr.mxu0 0.0
    %94 = vmatpush1.msra.mxu0 0.0
    %95 = vmatprep.subr.mxu0 0.0
    %96 = vmatpush1.msra.mxu0 0.0
    %97 = vmatprep.subr.mxu0 0.0
    %98 = vmatpush1.msra.mxu0 0.0
    %99 = vmatprep.subr.mxu0 0.0
    %100 = vmatpush1.msra.mxu0 0.0
    %101 = vmatprep.subr.mxu0 0.0
    %102 = vmatpush1.msra.mxu0 0.0
    %103 = vmatprep.subr.mxu0 0.0
    %104 = vmatpush1.msra.mxu0 0.0
    %105 = vmatprep.subr.mxu0 0.0
    %106 = vmatpush1.msra.mxu0 0.0
    %107 = vmatprep.subr.mxu0 0.0
    %108 = vmatpush1.msra.mxu0 0.0
    %109 = vmatprep.subr.mxu0 0.0
    %110 = vmatpush1.msra.mxu0 0.0
    %111 = vmatprep.subr.mxu0 0.0
    %112 = vmatpush1.msra.mxu0 0.0
    %113 = vmatprep.subr.mxu0 0.0
    %114 = vmatpush1.msra.mxu0 0.0
    %115 = vmatprep.subr.mxu0 0.0
    %116 = vmatpush1.msra.mxu0 0.0
    %117 = vmatprep.subr.mxu0 0.0
    %118 = vmatpush1.msra.mxu0 0.0
    %119 = vmatprep.subr.mxu0 0.0
    %120 = vmatpush1.msra.mxu0 0.0
    %121 = vmatprep.subr.mxu0 0.0
    %122 = vmatpush1.msra.mxu0 0.0
    %123 = vmatprep.subr.mxu0 0.0
    %124 = vmatpush1.msra.mxu0 0.0
    %125 = vmatprep.mubr.f32.mxu0 0.0
    %126 = vmatmul.mubr.f32.gmra.mrb[0].mxu0 %v56
    %v127 = vpop.f32.mrb[0].mxu0
    %v128 = vadd.f32 %v52, %v127
    %v129 = vpop.f32.mrb[0].mxu0
    %130 = vmatprep.mubr.f32.mxu0 0.0
    %131 = vmatmul.mubr.f32.gmra.mrb[0].mxu0 %v59
    %v132 = vpop.f32.mrb[0].mxu0
    %v133 = vadd.f32 %v52, %v132
    %v134 = vpop.f32.mrb[0].mxu0
    %135 = vdwg.mxu0
    %v136 = vld [vmem:[%s1] sm:$0xff]
    %v137 = vld [vmem:[%s1 + $0x8] sm:$0xff]
    %v138 = vld [vmem:[%s4] sm:$0xff]
    %v139 = vld [vmem:[%s4 + $0x8] sm:$0xff]
    %v140 = vld [vmem:[%s4 + $0x10] sm:$0xff]
    %v141 = vld [vmem:[%s4 + $0x18] sm:$0xff]
    %v142 = vld [vmem:[%s8] sm:$0x1]
    %v144 = vlaneseq
    %v145 = vshrl.u32 %v144, 7
    %v146 = vsub.s32 0, %v145
    %v147 = vrot.slane %v142, %v146
    %v150 = vsel %vm54, %v136, 0
    %v153 = vsel %vm54, %v137, 0
    %155 = vmatprep.subr.mxu0 0.0
    %156 = vmatpush1.msra.mxu0 %v138
    %157 = vmatprep.subr.mxu0 0.0
    %158 = vmatpush1.msra.mxu0 %v139
    %159 = vmatprep.subr.mxu0 0.0
    %160 = vmatpush1.msra.mxu0 %v140
    %161 = vmatprep.subr.mxu0 0.0
    %162 = vmatpush1.msra.mxu0 %v141
    %163 = vmatprep.subr.mxu0 0.0
    %164 = vmatpush1.msra.mxu0 0.0
    %165 = vmatprep.subr.mxu0 0.0
    %166 = vmatpush1.msra.mxu0 0.0
    %167 = vmatprep.subr.mxu0 0.0
    %168 = vmatpush1.msra.mxu0 0.0
    %169 = vmatprep.subr.mxu0 0.0
    %170 = vmatpush1.msra.mxu0 0.0
    %171 = vmatprep.subr.mxu0 0.0
    %172 = vmatpush1.msra.mxu0 0.0
    %173 = vmatprep.subr.mxu0 0.0
    %174 = vmatpush1.msra.mxu0 0.0
    %175 = vmatprep.subr.mxu0 0.0
    %176 = vmatpush1.msra.mxu0 0.0
    %177 = vmatprep.subr.mxu0 0.0
    %178 = vmatpush1.msra.mxu0 0.0
    %179 = vmatprep.subr.mxu0 0.0
    %180 = vmatpush1.msra.mxu0 0.0
    %181 = vmatprep.subr.mxu0 0.0
    %182 = vmatpush1.msra.mxu0 0.0
    %183 = vmatprep.subr.mxu0 0.0
    %184 = vmatpush1.msra.mxu0 0.0
    %185 = vmatprep.subr.mxu0 0.0
    %186 = vmatpush1.msra.mxu0 0.0
    %187 = vmatprep.subr.mxu0 0.0
    %188 = vmatpush1.msra.mxu0 0.0
    %189 = vmatprep.subr.mxu0 0.0
    %190 = vmatpush1.msra.mxu0 0.0
    %191 = vmatprep.subr.mxu0 0.0
    %192 = vmatpush1.msra.mxu0 0.0
    %193 = vmatprep.subr.mxu0 0.0
    %194 = vmatpush1.msra.mxu0 0.0
    %195 = vmatprep.subr.mxu0 0.0
    %196 = vmatpush1.msra.mxu0 0.0
    %197 = vmatprep.subr.mxu0 0.0
    %198 = vmatpush1.msra.mxu0 0.0
    %199 = vmatprep.subr.mxu0 0.0
    %200 = vmatpush1.msra.mxu0 0.0
    %201 = vmatprep.subr.mxu0 0.0
    %202 = vmatpush1.msra.mxu0 0.0
    %203 = vmatprep.subr.mxu0 0.0
    %204 = vmatpush1.msra.mxu0 0.0
    %205 = vmatprep.subr.mxu0 0.0
    %206 = vmatpush1.msra.mxu0 0.0
    %207 = vmatprep.subr.mxu0 0.0
    %208 = vmatpush1.msra.mxu0 0.0
    %209 = vmatprep.subr.mxu0 0.0
    %210 = vmatpush1.msra.mxu0 0.0
    %211 = vmatprep.subr.mxu0 0.0
    %212 = vmatpush1.msra.mxu0 0.0
    %213 = vmatprep.subr.mxu0 0.0
    %214 = vmatpush1.msra.mxu0 0.0
    %215 = vmatprep.subr.mxu0 0.0
    %216 = vmatpush1.msra.mxu0 0.0
    %217 = vmatprep.subr.mxu0 0.0
    %218 = vmatpush1.msra.mxu0 0.0
    %219 = vmatprep.mubr.f32.mxu0 0.0
    %220 = vmatmul.mubr.f32.gmra.mrb[0].mxu0 %v150
    %v221 = vpop.f32.mrb[0].mxu0
    %v222 = vadd.f32 %v147, %v221
    %v223 = vpop.f32.mrb[0].mxu0
    %224 = vmatprep.mubr.f32.mxu0 0.0
    %225 = vmatmul.mubr.f32.gmra.mrb[0].mxu0 %v153
    %v226 = vpop.f32.mrb[0].mxu0
    %v227 = vadd.f32 %v147, %v226
    %v228 = vpop.f32.mrb[0].mxu0
    %229 = vdwg.mxu0
    %v230 = vld [vmem:[%s2] sm:$0xff]
    %v231 = vld [vmem:[%s2 + $0x8] sm:$0xff]
    %v232 = vld [vmem:[%s5] sm:$0xff]
    %v233 = vld [vmem:[%s5 + $0x8] sm:$0xff]
    %v234 = vld [vmem:[%s5 + $0x10] sm:$0xff]
    %v235 = vld [vmem:[%s5 + $0x18] sm:$0xff]
    %v236 = vld [vmem:[%s9] sm:$0x1]
    %v238 = vlaneseq
    %v239 = vshrl.u32 %v238, 7
    %v240 = vsub.s32 0, %v239
    %v241 = vrot.slane %v236, %v240
    %v244 = vsel %vm54, %v230, 0
    %v247 = vsel %vm54, %v231, 0
    %249 = vmatprep.subr.mxu0 0.0
    %250 = vmatpush1.msra.mxu0 %v232
    %251 = vmatprep.subr.mxu0 0.0
    %252 = vmatpush1.msra.mxu0 %v233
    %253 = vmatprep.subr.mxu0 0.0
    %254 = vmatpush1.msra.mxu0 %v234
    %255 = vmatprep.subr.mxu0 0.0
    %256 = vmatpush1.msra.mxu0 %v235
    %257 = vmatprep.subr.mxu0 0.0
    %258 = vmatpush1.msra.mxu0 0.0
    %259 = vmatprep.subr.mxu0 0.0
    %260 = vmatpush1.msra.mxu0 0.0
    %261 = vmatprep.subr.mxu0 0.0
    %262 = vmatpush1.msra.mxu0 0.0
    %263 = vmatprep.subr.mxu0 0.0
    %264 = vmatpush1.msra.mxu0 0.0
    %265 = vmatprep.subr.mxu0 0.0
    %266 = vmatpush1.msra.mxu0 0.0
    %267 = vmatprep.subr.mxu0 0.0
    %268 = vmatpush1.msra.mxu0 0.0
    %269 = vmatprep.subr.mxu0 0.0
    %270 = vmatpush1.msra.mxu0 0.0
    %271 = vmatprep.subr.mxu0 0.0
    %272 = vmatpush1.msra.mxu0 0.0
    %273 = vmatprep.subr.mxu0 0.0
    %274 = vmatpush1.msra.mxu0 0.0
    %275 = vmatprep.subr.mxu0 0.0
    %276 = vmatpush1.msra.mxu0 0.0
    %277 = vmatprep.subr.mxu0 0.0
    %278 = vmatpush1.msra.mxu0 0.0
    %279 = vmatprep.subr.mxu0 0.0
    %280 = vmatpush1.msra.mxu0 0.0
    %281 = vmatprep.subr.mxu0 0.0
    %282 = vmatpush1.msra.mxu0 0.0
    %283 = vmatprep.subr.mxu0 0.0
    %284 = vmatpush1.msra.mxu0 0.0
    %285 = vmatprep.subr.mxu0 0.0
    %286 = vmatpush1.msra.mxu0 0.0
    %287 = vmatprep.subr.mxu0 0.0
    %288 = vmatpush1.msra.mxu0 0.0
    %289 = vmatprep.subr.mxu0 0.0
    %290 = vmatpush1.msra.mxu0 0.0
    %291 = vmatprep.subr.mxu0 0.0
    %292 = vmatpush1.msra.mxu0 0.0
    %293 = vmatprep.subr.mxu0 0.0
    %294 = vmatpush1.msra.mxu0 0.0
    %295 = vmatprep.subr.mxu0 0.0
    %296 = vmatpush1.msra.mxu0 0.0
    %297 = vmatprep.subr.mxu0 0.0
    %298 = vmatpush1.msra.mxu0 0.0
    %299 = vmatprep.subr.mxu0 0.0
    %300 = vmatpush1.msra.mxu0 0.0
    %301 = vmatprep.subr.mxu0 0.0
    %302 = vmatpush1.msra.mxu0 0.0
    %303 = vmatprep.subr.mxu0 0.0
    %304 = vmatpush1.msra.mxu0 0.0
    %305 = vmatprep.subr.mxu0 0.0
    %306 = vmatpush1.msra.mxu0 0.0
    %307 = vmatprep.subr.mxu0 0.0
    %308 = vmatpush1.msra.mxu0 0.0
    %309 = vmatprep.subr.mxu0 0.0
    %310 = vmatpush1.msra.mxu0 0.0
    %311 = vmatprep.subr.mxu0 0.0
    %312 = vmatpush1.msra.mxu0 0.0
    %313 = vmatprep.mubr.f32.mxu0 0.0
    %314 = vmatmul.mubr.f32.gmra.mrb[0].mxu0 %v244
    %v315 = vpop.f32.mrb[0].mxu0
    %v316 = vadd.f32 %v241, %v315
    %v317 = vpop.f32.mrb[0].mxu0
    %318 = vmatprep.mubr.f32.mxu0 0.0
    %319 = vmatmul.mubr.f32.gmra.mrb[0].mxu0 %v247
    %v320 = vpop.f32.mrb[0].mxu0
    %v321 = vadd.f32 %v241, %v320
    %v322 = vpop.f32.mrb[0].mxu0
    %323 = vdwg.mxu0
    %v324 = vmul.f32 %v128, 0.35355338
    %v325 = vmul.f32 %v133, 0.35355338
    %v326 = vld [vmem:[%s6] sm:$0xff]
    %v327 = vld [vmem:[%s6 + $0x8] sm:$0xff]
    %v328 = vld [vmem:[%s6 + $0x10] sm:$0xff]
    %v329 = vld [vmem:[%s6 + $0x18] sm:$0xff]
    %vm330 = vcmask 64512
    %v332 = vsel %vm330, %v324, 0
    %v335 = vsel %vm330, %v222, 0
    %337 = vmatprep.subr.mxu0 0.0
    %338 = vmatpush1.xpose.msra.mxu0 %v335
    %339 = vmatprep.subr.mxu0 0.0
    %340 = vmatpush1.xpose.msra.mxu0 0.0
    %341 = vmatprep.subr.mxu0 0.0
    %342 = vmatpush1.xpose.msra.mxu0 0.0
    %343 = vmatprep.subr.mxu0 0.0
    %344 = vmatpush1.xpose.msra.mxu0 0.0
    %345 = vmatprep.subr.mxu0 0.0
    %346 = vmatpush1.xpose.msra.mxu0 0.0
    %347 = vmatprep.subr.mxu0 0.0
    %348 = vmatpush1.xpose.msra.mxu0 0.0
    %349 = vmatprep.subr.mxu0 0.0
    %350 = vmatpush1.xpose.msra.mxu0 0.0
    %351 = vmatprep.subr.mxu0 0.0
    %352 = vmatpush1.xpose.msra.mxu0 0.0
    %353 = vmatprep.subr.mxu0 0.0
    %354 = vmatpush1.xpose.msra.mxu0 0.0
    %355 = vmatprep.subr.mxu0 0.0
    %356 = vmatpush1.xpose.msra.mxu0 0.0
    %357 = vmatprep.subr.mxu0 0.0
    %358 = vmatpush1.xpose.msra.mxu0 0.0
    %359 = vmatprep.subr.mxu0 0.0
    %360 = vmatpush1.xpose.msra.mxu0 0.0
    %361 = vmatprep.subr.mxu0 0.0
    %362 = vmatpush1.xpose.msra.mxu0 0.0
    %363 = vmatprep.subr.mxu0 0.0
    %364 = vmatpush1.xpose.msra.mxu0 0.0
    %365 = vmatprep.subr.mxu0 0.0
    %366 = vmatpush1.xpose.msra.mxu0 0.0
    %367 = vmatprep.subr.mxu0 0.0
    %368 = vmatpush1.xpose.msra.mxu0 0.0
    %369 = vmatprep.subr.mxu0 0.0
    %370 = vmatpush1.xpose.msra.mxu0 0.0
    %371 = vmatprep.subr.mxu0 0.0
    %372 = vmatpush1.xpose.msra.mxu0 0.0
    %373 = vmatprep.subr.mxu0 0.0
    %374 = vmatpush1.xpose.msra.mxu0 0.0
    %375 = vmatprep.subr.mxu0 0.0
    %376 = vmatpush1.xpose.msra.mxu0 0.0
    %377 = vmatprep.subr.mxu0 0.0
    %378 = vmatpush1.xpose.msra.mxu0 0.0
    %379 = vmatprep.subr.mxu0 0.0
    %380 = vmatpush1.xpose.msra.mxu0 0.0
    %381 = vmatprep.subr.mxu0 0.0
    %382 = vmatpush1.xpose.msra.mxu0 0.0
    %383 = vmatprep.subr.mxu0 0.0
    %384 = vmatpush1.xpose.msra.mxu0 0.0
    %385 = vmatprep.subr.mxu0 0.0
    %386 = vmatpush1.xpose.msra.mxu0 0.0
    %387 = vmatprep.subr.mxu0 0.0
    %388 = vmatpush1.xpose.msra.mxu0 0.0
    %389 = vmatprep.subr.mxu0 0.0
    %390 = vmatpush1.xpose.msra.mxu0 0.0
    %391 = vmatprep.subr.mxu0 0.0
    %392 = vmatpush1.xpose.msra.mxu0 0.0
    %393 = vmatprep.subr.mxu0 0.0
    %394 = vmatpush1.xpose.msra.mxu0 0.0
    %395 = vmatprep.subr.mxu0 0.0
    %396 = vmatpush1.xpose.msra.mxu0 0.0
    %397 = vmatprep.subr.mxu0 0.0
    %398 = vmatpush1.xpose.msra.mxu0 0.0
    %399 = vmatprep.subr.mxu0 0.0
    %400 = vmatpush1.xpose.msra.mxu0 0.0
    %401 = vmatprep.mubr.f32.mxu0 0.0
    %402 = vmatmul.mubr.f32.gmra.mrb[0].mxu0 %v332
    %v403 = vpop.f32.mrb[0].mxu0
    %v404 = vadd.f32 0.0, %v403
    %v405 = vpop.f32.mrb[0].mxu0
    %406 = vdwg.mxu0
    %v408 = vsel %vm330, %v325, 0
    %v411 = vsel %vm330, %v227, 0
    %413 = vmatprep.subr.mxu0 0.0
    %414 = vmatpush1.xpose.msra.mxu0 %v411
    %415 = vmatprep.subr.mxu0 0.0
    %416 = vmatpush1.xpose.msra.mxu0 0.0
    %417 = vmatprep.subr.mxu0 0.0
    %418 = vmatpush1.xpose.msra.mxu0 0.0
    %419 = vmatprep.subr.mxu0 0.0
    %420 = vmatpush1.xpose.msra.mxu0 0.0
    %421 = vmatprep.subr.mxu0 0.0
    %422 = vmatpush1.xpose.msra.mxu0 0.0
    %423 = vmatprep.subr.mxu0 0.0
    %424 = vmatpush1.xpose.msra.mxu0 0.0
    %425 = vmatprep.subr.mxu0 0.0
    %426 = vmatpush1.xpose.msra.mxu0 0.0
    %427 = vmatprep.subr.mxu0 0.0
    %428 = vmatpush1.xpose.msra.mxu0 0.0
    %429 = vmatprep.subr.mxu0 0.0
    %430 = vmatpush1.xpose.msra.mxu0 0.0
    %431 = vmatprep.subr.mxu0 0.0
    %432 = vmatpush1.xpose.msra.mxu0 0.0
    %433 = vmatprep.subr.mxu0 0.0
    %434 = vmatpush1.xpose.msra.mxu0 0.0
    %435 = vmatprep.subr.mxu0 0.0
    %436 = vmatpush1.xpose.msra.mxu0 0.0
    %437 = vmatprep.subr.mxu0 0.0
    %438 = vmatpush1.xpose.msra.mxu0 0.0
    %439 = vmatprep.subr.mxu0 0.0
    %440 = vmatpush1.xpose.msra.mxu0 0.0
    %441 = vmatprep.subr.mxu0 0.0
    %442 = vmatpush1.xpose.msra.mxu0 0.0
    %443 = vmatprep.subr.mxu0 0.0
    %444 = vmatpush1.xpose.msra.mxu0 0.0
    %445 = vmatprep.subr.mxu0 0.0
    %446 = vmatpush1.xpose.msra.mxu0 0.0
    %447 = vmatprep.subr.mxu0 0.0
    %448 = vmatpush1.xpose.msra.mxu0 0.0
    %449 = vmatprep.subr.mxu0 0.0
    %450 = vmatpush1.xpose.msra.mxu0 0.0
    %451 = vmatprep.subr.mxu0 0.0
    %452 = vmatpush1.xpose.msra.mxu0 0.0
    %453 = vmatprep.subr.mxu0 0.0
    %454 = vmatpush1.xpose.msra.mxu0 0.0
    %455 = vmatprep.subr.mxu0 0.0
    %456 = vmatpush1.xpose.msra.mxu0 0.0
    %457 = vmatprep.subr.mxu0 0.0
    %458 = vmatpush1.xpose.msra.mxu0 0.0
    %459 = vmatprep.subr.mxu0 0.0
    %460 = vmatpush1.xpose.msra.mxu0 0.0
    %461 = vmatprep.subr.mxu0 0.0
    %462 = vmatpush1.xpose.msra.mxu0 0.0
    %463 = vmatprep.subr.mxu0 0.0
    %464 = vmatpush1.xpose.msra.mxu0 0.0
    %465 = vmatprep.subr.mxu0 0.0
    %466 = vmatpush1.xpose.msra.mxu0 0.0
    %467 = vmatprep.subr.mxu0 0.0
    %468 = vmatpush1.xpose.msra.mxu0 0.0
    %469 = vmatprep.subr.mxu0 0.0
    %470 = vmatpush1.xpose.msra.mxu0 0.0
    %471 = vmatprep.subr.mxu0 0.0
    %472 = vmatpush1.xpose.msra.mxu0 0.0
    %473 = vmatprep.subr.mxu0 0.0
    %474 = vmatpush1.xpose.msra.mxu0 0.0
    %475 = vmatprep.subr.mxu0 0.0
    %476 = vmatpush1.xpose.msra.mxu0 0.0
    %477 = vmatprep.mubr.f32.mxu0 0.0
    %478 = vmatmul.mubr.f32.gmra.mrb[0].mxu0 %v408
    %v479 = vpop.f32.mrb[0].mxu0
    %v480 = vadd.f32 0.0, %v479
    %v481 = vpop.f32.mrb[0].mxu0
    %482 = vdwg.mxu0
    %v483 = vsel %vm330, %v404, -inf
    %484 = vmax.xlane.f32.xlu0 %v483
    %v485 = vpop.xlane.xlu0 %484
    %v486 = vsel %vm330, %v480, -inf
    %487 = vmax.xlane.f32.xlu0 %v486
    %v488 = vpop.xlane.xlu0 %487
    %v489 = vsub.f32 %v404, %v485
    %v490 = vsub.f32 %v480, %v488
    %v491 = vmul.f32 %v489, 1.442695
    %v492 = vpow.pop %v491
    %v493 = vmul.f32 %v490, 1.442695
    %v494 = vpow.pop %v493
    %v495 = vsel %vm330, %v492, 0.0
    %496 = vadd.xlane.f32.xlu0 %v495
    %v497 = vpop.xlane.xlu0 %496
    %v498 = vsel %vm330, %v494, 0.0
    %499 = vadd.xlane.f32.xlu0 %v498
    %v500 = vpop.xlane.xlu0 %499
    %v501 = vrcp.pop %v497
    %v502 = vrcp.pop %v500
    %v503 = vmul.f32 %v492, %v501
    %v504 = vmul.f32 %v494, %v502
    %v505 = vadd.f32 %v503, 0.0
    %v506 = vadd.f32 %v504, 0.0
    %v508 = vsel %vm330, %v503, 0
    %510 = vmatprep.subr.mxu0 0.0
    %511 = vmatpush1.msra.mxu0 %v316
    %512 = vmatprep.subr.mxu0 0.0
    %513 = vmatpush1.msra.mxu0 0.0
    %514 = vmatprep.subr.mxu0 0.0
    %515 = vmatpush1.msra.mxu0 0.0
    %516 = vmatprep.subr.mxu0 0.0
    %517 = vmatpush1.msra.mxu0 0.0
    %518 = vmatprep.subr.mxu0 0.0
    %519 = vmatpush1.msra.mxu0 0.0
    %520 = vmatprep.subr.mxu0 0.0
    %521 = vmatpush1.msra.mxu0 0.0
    %522 = vmatprep.subr.mxu0 0.0
    %523 = vmatpush1.msra.mxu0 0.0
    %524 = vmatprep.subr.mxu0 0.0
    %525 = vmatpush1.msra.mxu0 0.0
    %526 = vmatprep.subr.mxu0 0.0
    %527 = vmatpush1.msra.mxu0 0.0
    %528 = vmatprep.subr.mxu0 0.0
    %529 = vmatpush1.msra.mxu0 0.0
    %530 = vmatprep.subr.mxu0 0.0
    %531 = vmatpush1.msra.mxu0 0.0
    %532 = vmatprep.subr.mxu0 0.0
    %533 = vmatpush1.msra.mxu0 0.0
    %534 = vmatprep.subr.mxu0 0.0
    %535 = vmatpush1.msra.mxu0 0.0
    %536 = vmatprep.subr.mxu0 0.0
    %537 = vmatpush1.msra.mxu0 0.0
    %538 = vmatprep.subr.mxu0 0.0
    %539 = vmatpush1.msra.mxu0 0.0
    %540 = vmatprep.subr.mxu0 0.0
    %541 = vmatpush1.msra.mxu0 0.0
    %542 = vmatprep.subr.mxu0 0.0
    %543 = vmatpush1.msra.mxu0 0.0
    %544 = vmatprep.subr.mxu0 0.0
    %545 = vmatpush1.msra.mxu0 0.0
    %546 = vmatprep.subr.mxu0 0.0
    %547 = vmatpush1.msra.mxu0 0.0
    %548 = vmatprep.subr.mxu0 0.0
    %549 = vmatpush1.msra.mxu0 0.0
    %550 = vmatprep.subr.mxu0 0.0
    %551 = vmatpush1.msra.mxu0 0.0
    %552 = vmatprep.subr.mxu0 0.0
    %553 = vmatpush1.msra.mxu0 0.0
    %554 = vmatprep.subr.mxu0 0.0
    %555 = vmatpush1.msra.mxu0 0.0
    %556 = vmatprep.subr.mxu0 0.0
    %557 = vmatpush1.msra.mxu0 0.0
    %558 = vmatprep.subr.mxu0 0.0
    %559 = vmatpush1.msra.mxu0 0.0
    %560 = vmatprep.subr.mxu0 0.0
    %561 = vmatpush1.msra.mxu0 0.0
    %562 = vmatprep.subr.mxu0 0.0
    %563 = vmatpush1.msra.mxu0 0.0
    %564 = vmatprep.subr.mxu0 0.0
    %565 = vmatpush1.msra.mxu0 0.0
    %566 = vmatprep.subr.mxu0 0.0
    %567 = vmatpush1.msra.mxu0 0.0
    %568 = vmatprep.subr.mxu0 0.0
    %569 = vmatpush1.msra.mxu0 0.0
    %570 = vmatprep.subr.mxu0 0.0
    %571 = vmatpush1.msra.mxu0 0.0
    %572 = vmatprep.subr.mxu0 0.0
    %573 = vmatpush1.msra.mxu0 0.0
    %574 = vmatprep.mubr.f32.mxu0 0.0
    %575 = vmatmul.mubr.f32.gmra.mrb[0].mxu0 %v508
    %v576 = vpop.f32.mrb[0].mxu0
    %v577 = vadd.f32 0.0, %v576
    %v578 = vpop.f32.mrb[0].mxu0
    %579 = vdwg.mxu0
    %v581 = vsel %vm330, %v504, 0
    %583 = vmatprep.subr.mxu0 0.0
    %584 = vmatpush1.msra.mxu0 %v321
    %585 = vmatprep.subr.mxu0 0.0
    %586 = vmatpush1.msra.mxu0 0.0
    %587 = vmatprep.subr.mxu0 0.0
    %588 = vmatpush1.msra.mxu0 0.0
    %589 = vmatprep.subr.mxu0 0.0
    %590 = vmatpush1.msra.mxu0 0.0
    %591 = vmatprep.subr.mxu0 0.0
    %592 = vmatpush1.msra.mxu0 0.0
    %593 = vmatprep.subr.mxu0 0.0
    %594 = vmatpush1.msra.mxu0 0.0
    %595 = vmatprep.subr.mxu0 0.0
    %596 = vmatpush1.msra.mxu0 0.0
    %597 = vmatprep.subr.mxu0 0.0
    %598 = vmatpush1.msra.mxu0 0.0
    %599 = vmatprep.subr.mxu0 0.0
    %600 = vmatpush1.msra.mxu0 0.0
    %601 = vmatprep.subr.mxu0 0.0
    %602 = vmatpush1.msra.mxu0 0.0
    %603 = vmatprep.subr.mxu0 0.0
    %604 = vmatpush1.msra.mxu0 0.0
    %605 = vmatprep.subr.mxu0 0.0
    %606 = vmatpush1.msra.mxu0 0.0
    %607 = vmatprep.subr.mxu0 0.0
    %608 = vmatpush1.msra.mxu0 0.0
    %609 = vmatprep.subr.mxu0 0.0
    %610 = vmatpush1.msra.mxu0 0.0
    %611 = vmatprep.subr.mxu0 0.0
    %612 = vmatpush1.msra.mxu0 0.0
    %613 = vmatprep.subr.mxu0 0.0
    %614 = vmatpush1.msra.mxu0 0.0
    %615 = vmatprep.subr.mxu0 0.0
    %616 = vmatpush1.msra.mxu0 0.0
    %617 = vmatprep.subr.mxu0 0.0
    %618 = vmatpush1.msra.mxu0 0.0
    %619 = vmatprep.subr.mxu0 0.0
    %620 = vmatpush1.msra.mxu0 0.0
    %621 = vmatprep.subr.mxu0 0.0
    %622 = vmatpush1.msra.mxu0 0.0
    %623 = vmatprep.subr.mxu0 0.0
    %624 = vmatpush1.msra.mxu0 0.0
    %625 = vmatprep.subr.mxu0 0.0
    %626 = vmatpush1.msra.mxu0 0.0
    %627 = vmatprep.subr.mxu0 0.0
    %628 = vmatpush1.msra.mxu0 0.0
    %629 = vmatprep.subr.mxu0 0.0
    %630 = vmatpush1.msra.mxu0 0.0
    %631 = vmatprep.subr.mxu0 0.0
    %632 = vmatpush1.msra.mxu0 0.0
    %633 = vmatprep.subr.mxu0 0.0
    %634 = vmatpush1.msra.mxu0 0.0
    %635 = vmatprep.subr.mxu0 0.0
    %636 = vmatpush1.msra.mxu0 0.0
    %637 = vmatprep.subr.mxu0 0.0
    %638 = vmatpush1.msra.mxu0 0.0
    %639 = vmatprep.subr.mxu0 0.0
    %640 = vmatpush1.msra.mxu0 0.0
    %641 = vmatprep.subr.mxu0 0.0
    %642 = vmatpush1.msra.mxu0 0.0
    %643 = vmatprep.subr.mxu0 0.0
    %644 = vmatpush1.msra.mxu0 0.0
    %645 = vmatprep.subr.mxu0 0.0
    %646 = vmatpush1.msra.mxu0 0.0
    %647 = vmatprep.mubr.f32.mxu0 0.0
    %648 = vmatmul.mubr.f32.gmra.mrb[0].mxu0 %v581
    %v649 = vpop.f32.mrb[0].mxu0
    %v650 = vadd.f32 0.0, %v649
    %v651 = vpop.f32.mrb[0].mxu0
    %652 = vdwg.mxu0
    %653 = vrot.lane.b32.xlu0 %v324, 120
    %v654 = vpop.permute.xlu0 %653
    %655 = vrot.lane.b32.xlu0 %v222, 120
    %v656 = vpop.permute.xlu0 %655
    %v657 = vsel %vm330, %v654, 0
    %v659 = vsel %vm330, %v656, 0
    %661 = vmatprep.subr.mxu0 0.0
    %662 = vmatpush1.xpose.msra.mxu0 %v659
    %663 = vmatprep.subr.mxu0 0.0
    %664 = vmatpush1.xpose.msra.mxu0 0.0
    %665 = vmatprep.subr.mxu0 0.0
    %666 = vmatpush1.xpose.msra.mxu0 0.0
    %667 = vmatprep.subr.mxu0 0.0
    %668 = vmatpush1.xpose.msra.mxu0 0.0
    %669 = vmatprep.subr.mxu0 0.0
    %670 = vmatpush1.xpose.msra.mxu0 0.0
    %671 = vmatprep.subr.mxu0 0.0
    %672 = vmatpush1.xpose.msra.mxu0 0.0
    %673 = vmatprep.subr.mxu0 0.0
    %674 = vmatpush1.xpose.msra.mxu0 0.0
    %675 = vmatprep.subr.mxu0 0.0
    %676 = vmatpush1.xpose.msra.mxu0 0.0
    %677 = vmatprep.subr.mxu0 0.0
    %678 = vmatpush1.xpose.msra.mxu0 0.0
    %679 = vmatprep.subr.mxu0 0.0
    %680 = vmatpush1.xpose.msra.mxu0 0.0
    %681 = vmatprep.subr.mxu0 0.0
    %682 = vmatpush1.xpose.msra.mxu0 0.0
    %683 = vmatprep.subr.mxu0 0.0
    %684 = vmatpush1.xpose.msra.mxu0 0.0
    %685 = vmatprep.subr.mxu0 0.0
    %686 = vmatpush1.xpose.msra.mxu0 0.0
    %687 = vmatprep.subr.mxu0 0.0
    %688 = vmatpush1.xpose.msra.mxu0 0.0
    %689 = vmatprep.subr.mxu0 0.0
    %690 = vmatpush1.xpose.msra.mxu0 0.0
    %691 = vmatprep.subr.mxu0 0.0
    %692 = vmatpush1.xpose.msra.mxu0 0.0
    %693 = vmatprep.subr.mxu0 0.0
    %694 = vmatpush1.xpose.msra.mxu0 0.0
    %695 = vmatprep.subr.mxu0 0.0
    %696 = vmatpush1.xpose.msra.mxu0 0.0
    %697 = vmatprep.subr.mxu0 0.0
    %698 = vmatpush1.xpose.msra.mxu0 0.0
    %699 = vmatprep.subr.mxu0 0.0
    %700 = vmatpush1.xpose.msra.mxu0 0.0
    %701 = vmatprep.subr.mxu0 0.0
    %702 = vmatpush1.xpose.msra.mxu0 0.0
    %703 = vmatprep.subr.mxu0 0.0
    %704 = vmatpush1.xpose.msra.mxu0 0.0
    %705 = vmatprep.subr.mxu0 0.0
    %706 = vmatpush1.xpose.msra.mxu0 0.0
    %707 = vmatprep.subr.mxu0 0.0
    %708 = vmatpush1.xpose.msra.mxu0 0.0
    %709 = vmatprep.subr.mxu0 0.0
    %710 = vmatpush1.xpose.msra.mxu0 0.0
    %711 = vmatprep.subr.mxu0 0.0
    %712 = vmatpush1.xpose.msra.mxu0 0.0
    %713 = vmatprep.subr.mxu0 0.0
    %714 = vmatpush1.xpose.msra.mxu0 0.0
    %715 = vmatprep.subr.mxu0 0.0
    %716 = vmatpush1.xpose.msra.mxu0 0.0
    %717 = vmatprep.subr.mxu0 0.0
    %718 = vmatpush1.xpose.msra.mxu0 0.0
    %719 = vmatprep.subr.mxu0 0.0
    %720 = vmatpush1.xpose.msra.mxu0 0.0
    %721 = vmatprep.subr.mxu0 0.0
    %722 = vmatpush1.xpose.msra.mxu0 0.0
    %723 = vmatprep.subr.mxu0 0.0
    %724 = vmatpush1.xpose.msra.mxu0 0.0
    %725 = vmatprep.mubr.f32.mxu0 0.0
    %726 = vmatmul.mubr.f32.gmra.mrb[0].mxu0 %v657
    %v727 = vpop.f32.mrb[0].mxu0
    %v728 = vadd.f32 0.0, %v727
    %v729 = vpop.f32.mrb[0].mxu0
    %730 = vdwg.mxu0
    %731 = vrot.lane.b32.xlu0 %v325, 120
    %v732 = vpop.permute.xlu0 %731
    %733 = vrot.lane.b32.xlu0 %v227, 120
    %v734 = vpop.permute.xlu0 %733
    %v735 = vsel %vm330, %v732, 0
    %v737 = vsel %vm330, %v734, 0
    %739 = vmatprep.subr.mxu0 0.0
    %740 = vmatpush1.xpose.msra.mxu0 %v737
    %741 = vmatprep.subr.mxu0 0.0
    %742 = vmatpush1.xpose.msra.mxu0 0.0
    %743 = vmatprep.subr.mxu0 0.0
    %744 = vmatpush1.xpose.msra.mxu0 0.0
    %745 = vmatprep.subr.mxu0 0.0
    %746 = vmatpush1.xpose.msra.mxu0 0.0
    %747 = vmatprep.subr.mxu0 0.0
    %748 = vmatpush1.xpose.msra.mxu0 0.0
    %749 = vmatprep.subr.mxu0 0.0
    %750 = vmatpush1.xpose.msra.mxu0 0.0
    %751 = vmatprep.subr.mxu0 0.0
    %752 = vmatpush1.xpose.msra.mxu0 0.0
    %753 = vmatprep.subr.mxu0 0.0
    %754 = vmatpush1.xpose.msra.mxu0 0.0
    %755 = vmatprep.subr.mxu0 0.0
    %756 = vmatpush1.xpose.msra.mxu0 0.0
    %757 = vmatprep.subr.mxu0 0.0
    %758 = vmatpush1.xpose.msra.mxu0 0.0
    %759 = vmatprep.subr.mxu0 0.0
    %760 = vmatpush1.xpose.msra.mxu0 0.0
    %761 = vmatprep.subr.mxu0 0.0
    %762 = vmatpush1.xpose.msra.mxu0 0.0
    %763 = vmatprep.subr.mxu0 0.0
    %764 = vmatpush1.xpose.msra.mxu0 0.0
    %765 = vmatprep.subr.mxu0 0.0
    %766 = vmatpush1.xpose.msra.mxu0 0.0
    %767 = vmatprep.subr.mxu0 0.0
    %768 = vmatpush1.xpose.msra.mxu0 0.0
    %769 = vmatprep.subr.mxu0 0.0
    %770 = vmatpush1.xpose.msra.mxu0 0.0
    %771 = vmatprep.subr.mxu0 0.0
    %772 = vmatpush1.xpose.msra.mxu0 0.0
    %773 = vmatprep.subr.mxu0 0.0
    %774 = vmatpush1.xpose.msra.mxu0 0.0
    %775 = vmatprep.subr.mxu0 0.0
    %776 = vmatpush1.xpose.msra.mxu0 0.0
    %777 = vmatprep.subr.mxu0 0.0
    %778 = vmatpush1.xpose.msra.mxu0 0.0
    %779 = vmatprep.subr.mxu0 0.0
    %780 = vmatpush1.xpose.msra.mxu0 0.0
    %781 = vmatprep.subr.mxu0 0.0
    %782 = vmatpush1.xpose.msra.mxu0 0.0
    %783 = vmatprep.subr.mxu0 0.0
    %784 = vmatpush1.xpose.msra.mxu0 0.0
    %785 = vmatprep.subr.mxu0 0.0
    %786 = vmatpush1.xpose.msra.mxu0 0.0
    %787 = vmatprep.subr.mxu0 0.0
    %788 = vmatpush1.xpose.msra.mxu0 0.0
    %789 = vmatprep.subr.mxu0 0.0
    %790 = vmatpush1.xpose.msra.mxu0 0.0
    %791 = vmatprep.subr.mxu0 0.0
    %792 = vmatpush1.xpose.msra.mxu0 0.0
    %793 = vmatprep.subr.mxu0 0.0
    %794 = vmatpush1.xpose.msra.mxu0 0.0
    %795 = vmatprep.subr.mxu0 0.0
    %796 = vmatpush1.xpose.msra.mxu0 0.0
    %797 = vmatprep.subr.mxu0 0.0
    %798 = vmatpush1.xpose.msra.mxu0 0.0
    %799 = vmatprep.subr.mxu0 0.0
    %800 = vmatpush1.xpose.msra.mxu0 0.0
    %801 = vmatprep.subr.mxu0 0.0
    %802 = vmatpush1.xpose.msra.mxu0 0.0
    %803 = vmatprep.mubr.f32.mxu0 0.0
    %804 = vmatmul.mubr.f32.gmra.mrb[0].mxu0 %v735
    %v805 = vpop.f32.mrb[0].mxu0
    %v806 = vadd.f32 0.0, %v805
    %v807 = vpop.f32.mrb[0].mxu0
    %808 = vdwg.mxu0
    %v809 = vsel %vm330, %v728, -inf
    %810 = vmax.xlane.f32.xlu0 %v809
    %v811 = vpop.xlane.xlu0 %810
    %v812 = vsel %vm330, %v806, -inf
    %813 = vmax.xlane.f32.xlu0 %v812
    %v814 = vpop.xlane.xlu0 %813
    %v815 = vsub.f32 %v728, %v811
    %v816 = vsub.f32 %v806, %v814
    %v817 = vmul.f32 %v815, 1.442695
    %v818 = vpow.pop %v817
    %v819 = vmul.f32 %v816, 1.442695
    %v820 = vpow.pop %v819
    %v821 = vsel %vm330, %v818, 0.0
    %822 = vadd.xlane.f32.xlu0 %v821
    %v823 = vpop.xlane.xlu0 %822
    %v824 = vsel %vm330, %v820, 0.0
    %825 = vadd.xlane.f32.xlu0 %v824
    %v826 = vpop.xlane.xlu0 %825
    %v827 = vrcp.pop %v823
    %v828 = vrcp.pop %v826
    %v829 = vmul.f32 %v818, %v827
    %v830 = vmul.f32 %v820, %v828
    %v831 = vadd.f32 %v505, %v829
    %v832 = vadd.f32 %v506, %v830
    %834 = vrot.lane.b32.xlu0 %v316, 120
    %v835 = vpop.permute.xlu0 %834
    %v838 = vsel %vm330, %v829, 0
    %840 = vmatprep.subr.mxu0 0.0
    %841 = vmatpush1.msra.mxu0 %v835
    %842 = vmatprep.subr.mxu0 0.0
    %843 = vmatpush1.msra.mxu0 0.0
    %844 = vmatprep.subr.mxu0 0.0
    %845 = vmatpush1.msra.mxu0 0.0
    %846 = vmatprep.subr.mxu0 0.0
    %847 = vmatpush1.msra.mxu0 0.0
    %848 = vmatprep.subr.mxu0 0.0
    %849 = vmatpush1.msra.mxu0 0.0
    %850 = vmatprep.subr.mxu0 0.0
    %851 = vmatpush1.msra.mxu0 0.0
    %852 = vmatprep.subr.mxu0 0.0
    %853 = vmatpush1.msra.mxu0 0.0
    %854 = vmatprep.subr.mxu0 0.0
    %855 = vmatpush1.msra.mxu0 0.0
    %856 = vmatprep.subr.mxu0 0.0
    %857 = vmatpush1.msra.mxu0 0.0
    %858 = vmatprep.subr.mxu0 0.0
    %859 = vmatpush1.msra.mxu0 0.0
    %860 = vmatprep.subr.mxu0 0.0
    %861 = vmatpush1.msra.mxu0 0.0
    %862 = vmatprep.subr.mxu0 0.0
    %863 = vmatpush1.msra.mxu0 0.0
    %864 = vmatprep.subr.mxu0 0.0
    %865 = vmatpush1.msra.mxu0 0.0
    %866 = vmatprep.subr.mxu0 0.0
    %867 = vmatpush1.msra.mxu0 0.0
    %868 = vmatprep.subr.mxu0 0.0
    %869 = vmatpush1.msra.mxu0 0.0
    %870 = vmatprep.subr.mxu0 0.0
    %871 = vmatpush1.msra.mxu0 0.0
    %872 = vmatprep.subr.mxu0 0.0
    %873 = vmatpush1.msra.mxu0 0.0
    %874 = vmatprep.subr.mxu0 0.0
    %875 = vmatpush1.msra.mxu0 0.0
    %876 = vmatprep.subr.mxu0 0.0
    %877 = vmatpush1.msra.mxu0 0.0
    %878 = vmatprep.subr.mxu0 0.0
    %879 = vmatpush1.msra.mxu0 0.0
    %880 = vmatprep.subr.mxu0 0.0
    %881 = vmatpush1.msra.mxu0 0.0
    %882 = vmatprep.subr.mxu0 0.0
    %883 = vmatpush1.msra.mxu0 0.0
    %884 = vmatprep.subr.mxu0 0.0
    %885 = vmatpush1.msra.mxu0 0.0
    %886 = vmatprep.subr.mxu0 0.0
    %887 = vmatpush1.msra.mxu0 0.0
    %888 = vmatprep.subr.mxu0 0.0
    %889 = vmatpush1.msra.mxu0 0.0
    %890 = vmatprep.subr.mxu0 0.0
    %891 = vmatpush1.msra.mxu0 0.0
    %892 = vmatprep.subr.mxu0 0.0
    %893 = vmatpush1.msra.mxu0 0.0
    %894 = vmatprep.subr.mxu0 0.0
    %895 = vmatpush1.msra.mxu0 0.0
    %896 = vmatprep.subr.mxu0 0.0
    %897 = vmatpush1.msra.mxu0 0.0
    %898 = vmatprep.subr.mxu0 0.0
    %899 = vmatpush1.msra.mxu0 0.0
    %900 = vmatprep.subr.mxu0 0.0
    %901 = vmatpush1.msra.mxu0 0.0
    %902 = vmatprep.subr.mxu0 0.0
    %903 = vmatpush1.msra.mxu0 0.0
    %904 = vmatprep.mubr.f32.mxu0 0.0
    %905 = vmatmul.mubr.f32.gmra.mrb[0].mxu0 %v838
    %v906 = vpop.f32.mrb[0].mxu0
    %v907 = vadd.f32 0.0, %v906
    %v908 = vpop.f32.mrb[0].mxu0
    %909 = vdwg.mxu0
    %911 = vrot.lane.b32.xlu0 %v321, 120
    %v912 = vpop.permute.xlu0 %911
    %v915 = vsel %vm330, %v830, 0
    %917 = vmatprep.subr.mxu0 0.0
    %918 = vmatpush1.msra.mxu0 %v912
    %919 = vmatprep.subr.mxu0 0.0
    %920 = vmatpush1.msra.mxu0 0.0
    %921 = vmatprep.subr.mxu0 0.0
    %922 = vmatpush1.msra.mxu0 0.0
    %923 = vmatprep.subr.mxu0 0.0
    %924 = vmatpush1.msra.mxu0 0.0
    %925 = vmatprep.subr.mxu0 0.0
    %926 = vmatpush1.msra.mxu0 0.0
    %927 = vmatprep.subr.mxu0 0.0
    %928 = vmatpush1.msra.mxu0 0.0
    %929 = vmatprep.subr.mxu0 0.0
    %930 = vmatpush1.msra.mxu0 0.0
    %931 = vmatprep.subr.mxu0 0.0
    %932 = vmatpush1.msra.mxu0 0.0
    %933 = vmatprep.subr.mxu0 0.0
    %934 = vmatpush1.msra.mxu0 0.0
    %935 = vmatprep.subr.mxu0 0.0
    %936 = vmatpush1.msra.mxu0 0.0
    %937 = vmatprep.subr.mxu0 0.0
    %938 = vmatpush1.msra.mxu0 0.0
    %939 = vmatprep.subr.mxu0 0.0
    %940 = vmatpush1.msra.mxu0 0.0
    %941 = vmatprep.subr.mxu0 0.0
    %942 = vmatpush1.msra.mxu0 0.0
    %943 = vmatprep.subr.mxu0 0.0
    %944 = vmatpush1.msra.mxu0 0.0
    %945 = vmatprep.subr.mxu0 0.0
    %946 = vmatpush1.msra.mxu0 0.0
    %947 = vmatprep.subr.mxu0 0.0
    %948 = vmatpush1.msra.mxu0 0.0
    %949 = vmatprep.subr.mxu0 0.0
    %950 = vmatpush1.msra.mxu0 0.0
    %951 = vmatprep.subr.mxu0 0.0
    %952 = vmatpush1.msra.mxu0 0.0
    %953 = vmatprep.subr.mxu0 0.0
    %954 = vmatpush1.msra.mxu0 0.0
    %955 = vmatprep.subr.mxu0 0.0
    %956 = vmatpush1.msra.mxu0 0.0
    %957 = vmatprep.subr.mxu0 0.0
    %958 = vmatpush1.msra.mxu0 0.0
    %959 = vmatprep.subr.mxu0 0.0
    %960 = vmatpush1.msra.mxu0 0.0
    %961 = vmatprep.subr.mxu0 0.0
    %962 = vmatpush1.msra.mxu0 0.0
    %963 = vmatprep.subr.mxu0 0.0
    %964 = vmatpush1.msra.mxu0 0.0
    %965 = vmatprep.subr.mxu0 0.0
    %966 = vmatpush1.msra.mxu0 0.0
    %967 = vmatprep.subr.mxu0 0.0
    %968 = vmatpush1.msra.mxu0 0.0
    %969 = vmatprep.subr.mxu0 0.0
    %970 = vmatpush1.msra.mxu0 0.0
    %971 = vmatprep.subr.mxu0 0.0
    %972 = vmatpush1.msra.mxu0 0.0
    %973 = vmatprep.subr.mxu0 0.0
    %974 = vmatpush1.msra.mxu0 0.0
    %975 = vmatprep.subr.mxu0 0.0
    %976 = vmatpush1.msra.mxu0 0.0
    %977 = vmatprep.subr.mxu0 0.0
    %978 = vmatpush1.msra.mxu0 0.0
    %979 = vmatprep.subr.mxu0 0.0
    %980 = vmatpush1.msra.mxu0 0.0
    %981 = vmatprep.mubr.f32.mxu0 0.0
    %982 = vmatmul.mubr.f32.gmra.mrb[0].mxu0 %v915
    %v983 = vpop.f32.mrb[0].mxu0
    %v984 = vadd.f32 0.0, %v983
    %v985 = vpop.f32.mrb[0].mxu0
    %986 = vdwg.mxu0
    %v988 = vsel %vm330, %v907, 0
    %v991 = vsel %vm330, %v984, 0
    %993 = vmatprep.subr.mxu0 0.0
    %994 = vmatpush1.msra.mxu0 %v327
    %995 = vmatprep.subr.mxu0 0.0
    %996 = vmatpush1.msra.mxu0 0.0
    %997 = vmatprep.subr.mxu0 0.0
    %998 = vmatpush1.msra.mxu0 0.0
    %999 = vmatprep.subr.mxu0 0.0
    %1000 = vmatpush1.msra.mxu0 0.0
    %1001 = vmatprep.subr.mxu0 0.0
    %1002 = vmatpush1.msra.mxu0 0.0
    %1003 = vmatprep.subr.mxu0 0.0
    %1004 = vmatpush1.msra.mxu0 0.0
    %1005 = vmatprep.subr.mxu0 0.0
    %1006 = vmatpush1.msra.mxu0 0.0
    %1007 = vmatprep.subr.mxu0 0.0
    %1008 = vmatpush1.msra.mxu0 0.0
    %1009 = vmatprep.subr.mxu0 0.0
    %1010 = vmatpush1.msra.mxu0 0.0
    %1011 = vmatprep.subr.mxu0 0.0
    %1012 = vmatpush1.msra.mxu0 0.0
    %1013 = vmatprep.subr.mxu0 0.0
    %1014 = vmatpush1.msra.mxu0 0.0
    %1015 = vmatprep.subr.mxu0 0.0
    %1016 = vmatpush1.msra.mxu0 0.0
    %1017 = vmatprep.subr.mxu0 0.0
    %1018 = vmatpush1.msra.mxu0 0.0
    %1019 = vmatprep.subr.mxu0 0.0
    %1020 = vmatpush1.msra.mxu0 0.0
    %1021 = vmatprep.subr.mxu0 0.0
    %1022 = vmatpush1.msra.mxu0 0.0
    %1023 = vmatprep.subr.mxu0 0.0
    %1024 = vmatpush1.msra.mxu0 0.0
    %1025 = vmatprep.subr.mxu0 0.0
    %1026 = vmatpush1.msra.mxu0 0.0
    %1027 = vmatprep.subr.mxu0 0.0
    %1028 = vmatpush1.msra.mxu0 0.0
    %1029 = vmatprep.subr.mxu0 0.0
    %1030 = vmatpush1.msra.mxu0 0.0
    %1031 = vmatprep.subr.mxu0 0.0
    %1032 = vmatpush1.msra.mxu0 0.0
    %1033 = vmatprep.subr.mxu0 0.0
    %1034 = vmatpush1.msra.mxu0 0.0
    %1035 = vmatprep.subr.mxu0 0.0
    %1036 = vmatpush1.msra.mxu0 0.0
    %1037 = vmatprep.subr.mxu0 0.0
    %1038 = vmatpush1.msra.mxu0 0.0
    %1039 = vmatprep.subr.mxu0 0.0
    %1040 = vmatpush1.msra.mxu0 0.0
    %1041 = vmatprep.subr.mxu0 0.0
    %1042 = vmatpush1.msra.mxu0 0.0
    %1043 = vmatprep.subr.mxu0 0.0
    %1044 = vmatpush1.msra.mxu0 0.0
    %1045 = vmatprep.subr.mxu0 0.0
    %1046 = vmatpush1.msra.mxu0 0.0
    %1047 = vmatprep.subr.mxu0 0.0
    %1048 = vmatpush1.msra.mxu0 0.0
    %1049 = vmatprep.subr.mxu0 0.0
    %1050 = vmatpush1.msra.mxu0 0.0
    %1051 = vmatprep.subr.mxu0 0.0
    %1052 = vmatpush1.msra.mxu0 0.0
    %1053 = vmatprep.subr.mxu0 0.0
    %1054 = vmatpush1.msra.mxu0 0.0
    %1055 = vmatprep.subr.mxu0 0.0
    %1056 = vmatpush1.msra.mxu0 0.0
    %1057 = vmatprep.mubr.f32.mxu0 0.0
    %1058 = vmatmul.mubr.f32.gmra.mrb[0].mxu0 %v988
    %v1059 = vpop.f32.mrb[0].mxu0
    %v1060 = vadd.f32 0.0, %v1059
    %v1061 = vpop.f32.mrb[0].mxu0
    %1062 = vmatprep.mubr.f32.mxu0 0.0
    %1063 = vmatmul.mubr.f32.gmra.mrb[0].mxu0 %v991
    %v1064 = vpop.f32.mrb[0].mxu0
    %v1065 = vadd.f32 0.0, %v1064
    %v1066 = vpop.f32.mrb[0].mxu0
    %1067 = vdwg.mxu0
    %v1069 = vsel %vm330, %v577, 0
    %v1072 = vsel %vm330, %v650, 0
    %1074 = vmatprep.subr.mxu0 0.0
    %1075 = vmatpush1.msra.mxu0 %v326
    %1076 = vmatprep.subr.mxu0 0.0
    %1077 = vmatpush1.msra.mxu0 0.0
    %1078 = vmatprep.subr.mxu0 0.0
    %1079 = vmatpush1.msra.mxu0 0.0
    %1080 = vmatprep.subr.mxu0 0.0
    %1081 = vmatpush1.msra.mxu0 0.0
    %1082 = vmatprep.subr.mxu0 0.0
    %1083 = vmatpush1.msra.mxu0 0.0
    %1084 = vmatprep.subr.mxu0 0.0
    %1085 = vmatpush1.msra.mxu0 0.0
    %1086 = vmatprep.subr.mxu0 0.0
    %1087 = vmatpush1.msra.mxu0 0.0
    %1088 = vmatprep.subr.mxu0 0.0
    %1089 = vmatpush1.msra.mxu0 0.0
    %1090 = vmatprep.subr.mxu0 0.0
    %1091 = vmatpush1.msra.mxu0 0.0
    %1092 = vmatprep.subr.mxu0 0.0
    %1093 = vmatpush1.msra.mxu0 0.0
    %1094 = vmatprep.subr.mxu0 0.0
    %1095 = vmatpush1.msra.mxu0 0.0
    %1096 = vmatprep.subr.mxu0 0.0
    %1097 = vmatpush1.msra.mxu0 0.0
    %1098 = vmatprep.subr.mxu0 0.0
    %1099 = vmatpush1.msra.mxu0 0.0
    %1100 = vmatprep.subr.mxu0 0.0
    %1101 = vmatpush1.msra.mxu0 0.0
    %1102 = vmatprep.subr.mxu0 0.0
    %1103 = vmatpush1.msra.mxu0 0.0
    %1104 = vmatprep.subr.mxu0 0.0
    %1105 = vmatpush1.msra.mxu0 0.0
    %1106 = vmatprep.subr.mxu0 0.0
    %1107 = vmatpush1.msra.mxu0 0.0
    %1108 = vmatprep.subr.mxu0 0.0
    %1109 = vmatpush1.msra.mxu0 0.0
    %1110 = vmatprep.subr.mxu0 0.0
    %1111 = vmatpush1.msra.mxu0 0.0
    %1112 = vmatprep.subr.mxu0 0.0
    %1113 = vmatpush1.msra.mxu0 0.0
    %1114 = vmatprep.subr.mxu0 0.0
    %1115 = vmatpush1.msra.mxu0 0.0
    %1116 = vmatprep.subr.mxu0 0.0
    %1117 = vmatpush1.msra.mxu0 0.0
    %1118 = vmatprep.subr.mxu0 0.0
    %1119 = vmatpush1.msra.mxu0 0.0
    %1120 = vmatprep.subr.mxu0 0.0
    %1121 = vmatpush1.msra.mxu0 0.0
    %1122 = vmatprep.subr.mxu0 0.0
    %1123 = vmatpush1.msra.mxu0 0.0
    %1124 = vmatprep.subr.mxu0 0.0
    %1125 = vmatpush1.msra.mxu0 0.0
    %1126 = vmatprep.subr.mxu0 0.0
    %1127 = vmatpush1.msra.mxu0 0.0
    %1128 = vmatprep.subr.mxu0 0.0
    %1129 = vmatpush1.msra.mxu0 0.0
    %1130 = vmatprep.subr.mxu0 0.0
    %1131 = vmatpush1.msra.mxu0 0.0
    %1132 = vmatprep.subr.mxu0 0.0
    %1133 = vmatpush1.msra.mxu0 0.0
    %1134 = vmatprep.subr.mxu0 0.0
    %1135 = vmatpush1.msra.mxu0 0.0
    %1136 = vmatprep.subr.mxu0 0.0
    %1137 = vmatpush1.msra.mxu0 0.0
    %1138 = vmatprep.mubr.f32.mxu0 0.0
    %1139 = vmatmul.mubr.f32.gmra.mrb[0].mxu0 %v1069
    %v1140 = vpop.f32.mrb[0].mxu0
    %v1141 = vadd.f32 %v1060, %v1140
    %v1142 = vpop.f32.mrb[0].mxu0
    %1143 = vmatprep.mubr.f32.mxu0 0.0
    %1144 = vmatmul.mubr.f32.gmra.mrb[0].mxu0 %v1072
    %v1145 = vpop.f32.mrb[0].mxu0
    %v1146 = vadd.f32 %v1065, %v1145
    %v1147 = vpop.f32.mrb[0].mxu0
    %1148 = vdwg.mxu0
    %1149 = vrot.lane.b32.xlu0 %v324, 112
    %v1150 = vpop.permute.xlu0 %1149
    %1151 = vrot.lane.b32.xlu0 %v222, 112
    %v1152 = vpop.permute.xlu0 %1151
    %v1153 = vsel %vm330, %v1150, 0
    %v1155 = vsel %vm330, %v1152, 0
    %1157 = vmatprep.subr.mxu0 0.0
    %1158 = vmatpush1.xpose.msra.mxu0 %v1155
    %1159 = vmatprep.subr.mxu0 0.0
    %1160 = vmatpush1.xpose.msra.mxu0 0.0
    %1161 = vmatprep.subr.mxu0 0.0
    %1162 = vmatpush1.xpose.msra.mxu0 0.0
    %1163 = vmatprep.subr.mxu0 0.0
    %1164 = vmatpush1.xpose.msra.mxu0 0.0
    %1165 = vmatprep.subr.mxu0 0.0
    %1166 = vmatpush1.xpose.msra.mxu0 0.0
    %1167 = vmatprep.subr.mxu0 0.0
    %1168 = vmatpush1.xpose.msra.mxu0 0.0
    %1169 = vmatprep.subr.mxu0 0.0
    %1170 = vmatpush1.xpose.msra.mxu0 0.0
    %1171 = vmatprep.subr.mxu0 0.0
    %1172 = vmatpush1.xpose.msra.mxu0 0.0
    %1173 = vmatprep.subr.mxu0 0.0
    %1174 = vmatpush1.xpose.msra.mxu0 0.0
    %1175 = vmatprep.subr.mxu0 0.0
    %1176 = vmatpush1.xpose.msra.mxu0 0.0
    %1177 = vmatprep.subr.mxu0 0.0
    %1178 = vmatpush1.xpose.msra.mxu0 0.0
    %1179 = vmatprep.subr.mxu0 0.0
    %1180 = vmatpush1.xpose.msra.mxu0 0.0
    %1181 = vmatprep.subr.mxu0 0.0
    %1182 = vmatpush1.xpose.msra.mxu0 0.0
    %1183 = vmatprep.subr.mxu0 0.0
    %1184 = vmatpush1.xpose.msra.mxu0 0.0
    %1185 = vmatprep.subr.mxu0 0.0
    %1186 = vmatpush1.xpose.msra.mxu0 0.0
    %1187 = vmatprep.subr.mxu0 0.0
    %1188 = vmatpush1.xpose.msra.mxu0 0.0
    %1189 = vmatprep.subr.mxu0 0.0
    %1190 = vmatpush1.xpose.msra.mxu0 0.0
    %1191 = vmatprep.subr.mxu0 0.0
    %1192 = vmatpush1.xpose.msra.mxu0 0.0
    %1193 = vmatprep.subr.mxu0 0.0
    %1194 = vmatpush1.xpose.msra.mxu0 0.0
    %1195 = vmatprep.subr.mxu0 0.0
    %1196 = vmatpush1.xpose.msra.mxu0 0.0
    %1197 = vmatprep.subr.mxu0 0.0
    %1198 = vmatpush1.xpose.msra.mxu0 0.0
    %1199 = vmatprep.subr.mxu0 0.0
    %1200 = vmatpush1.xpose.msra.mxu0 0.0
    %1201 = vmatprep.subr.mxu0 0.0
    %1202 = vmatpush1.xpose.msra.mxu0 0.0
    %1203 = vmatprep.subr.mxu0 0.0
    %1204 = vmatpush1.xpose.msra.mxu0 0.0
    %1205 = vmatprep.subr.mxu0 0.0
    %1206 = vmatpush1.xpose.msra.mxu0 0.0
    %1207 = vmatprep.subr.mxu0 0.0
    %1208 = vmatpush1.xpose.msra.mxu0 0.0
    %1209 = vmatprep.subr.mxu0 0.0
    %1210 = vmatpush1.xpose.msra.mxu0 0.0
    %1211 = vmatprep.subr.mxu0 0.0
    %1212 = vmatpush1.xpose.msra.mxu0 0.0
    %1213 = vmatprep.subr.mxu0 0.0
    %1214 = vmatpush1.xpose.msra.mxu0 0.0
    %1215 = vmatprep.subr.mxu0 0.0
    %1216 = vmatpush1.xpose.msra.mxu0 0.0
    %1217 = vmatprep.subr.mxu0 0.0
    %1218 = vmatpush1.xpose.msra.mxu0 0.0
    %1219 = vmatprep.subr.mxu0 0.0
    %1220 = vmatpush1.xpose.msra.mxu0 0.0
    %1221 = vmatprep.mubr.f32.mxu0 0.0
    %1222 = vmatmul.mubr.f32.gmra.mrb[0].mxu0 %v1153
    %v1223 = vpop.f32.mrb[0].mxu0
    %v1224 = vadd.f32 0.0, %v1223
    %v1225 = vpop.f32.mrb[0].mxu0
    %1226 = vdwg.mxu0
    %1227 = vrot.lane.b32.xlu0 %v325, 112
    %v1228 = vpop.permute.xlu0 %1227
    %1229 = vrot.lane.b32.xlu0 %v227, 112
    %v1230 = vpop.permute.xlu0 %1229
    %v1231 = vsel %vm330, %v1228, 0
    %v1233 = vsel %vm330, %v1230, 0
    %1235 = vmatprep.subr.mxu0 0.0
    %1236 = vmatpush1.xpose.msra.mxu0 %v1233
    %1237 = vmatprep.subr.mxu0 0.0
    %1238 = vmatpush1.xpose.msra.mxu0 0.0
    %1239 = vmatprep.subr.mxu0 0.0
    %1240 = vmatpush1.xpose.msra.mxu0 0.0
    %1241 = vmatprep.subr.mxu0 0.0
    %1242 = vmatpush1.xpose.msra.mxu0 0.0
    %1243 = vmatprep.subr.mxu0 0.0
    %1244 = vmatpush1.xpose.msra.mxu0 0.0
    %1245 = vmatprep.subr.mxu0 0.0
    %1246 = vmatpush1.xpose.msra.mxu0 0.0
    %1247 = vmatprep.subr.mxu0 0.0
    %1248 = vmatpush1.xpose.msra.mxu0 0.0
    %1249 = vmatprep.subr.mxu0 0.0
    %1250 = vmatpush1.xpose.msra.mxu0 0.0
    %1251 = vmatprep.subr.mxu0 0.0
    %1252 = vmatpush1.xpose.msra.mxu0 0.0
    %1253 = vmatprep.subr.mxu0 0.0
    %1254 = vmatpush1.xpose.msra.mxu0 0.0
    %1255 = vmatprep.subr.mxu0 0.0
    %1256 = vmatpush1.xpose.msra.mxu0 0.0
    %1257 = vmatprep.subr.mxu0 0.0
    %1258 = vmatpush1.xpose.msra.mxu0 0.0
    %1259 = vmatprep.subr.mxu0 0.0
    %1260 = vmatpush1.xpose.msra.mxu0 0.0
    %1261 = vmatprep.subr.mxu0 0.0
    %1262 = vmatpush1.xpose.msra.mxu0 0.0
    %1263 = vmatprep.subr.mxu0 0.0
    %1264 = vmatpush1.xpose.msra.mxu0 0.0
    %1265 = vmatprep.subr.mxu0 0.0
    %1266 = vmatpush1.xpose.msra.mxu0 0.0
    %1267 = vmatprep.subr.mxu0 0.0
    %1268 = vmatpush1.xpose.msra.mxu0 0.0
    %1269 = vmatprep.subr.mxu0 0.0
    %1270 = vmatpush1.xpose.msra.mxu0 0.0
    %1271 = vmatprep.subr.mxu0 0.0
    %1272 = vmatpush1.xpose.msra.mxu0 0.0
    %1273 = vmatprep.subr.mxu0 0.0
    %1274 = vmatpush1.xpose.msra.mxu0 0.0
    %1275 = vmatprep.subr.mxu0 0.0
    %1276 = vmatpush1.xpose.msra.mxu0 0.0
    %1277 = vmatprep.subr.mxu0 0.0
    %1278 = vmatpush1.xpose.msra.mxu0 0.0
    %1279 = vmatprep.subr.mxu0 0.0
    %1280 = vmatpush1.xpose.msra.mxu0 0.0
    %1281 = vmatprep.subr.mxu0 0.0
    %1282 = vmatpush1.xpose.msra.mxu0 0.0
    %1283 = vmatprep.subr.mxu0 0.0
    %1284 = vmatpush1.xpose.msra.mxu0 0.0
    %1285 = vmatprep.subr.mxu0 0.0
    %1286 = vmatpush1.xpose.msra.mxu0 0.0
    %1287 = vmatprep.subr.mxu0 0.0
    %1288 = vmatpush1.xpose.msra.mxu0 0.0
    %1289 = vmatprep.subr.mxu0 0.0
    %1290 = vmatpush1.xpose.msra.mxu0 0.0
    %1291 = vmatprep.subr.mxu0 0.0
    %1292 = vmatpush1.xpose.msra.mxu0 0.0
    %1293 = vmatprep.subr.mxu0 0.0
    %1294 = vmatpush1.xpose.msra.mxu0 0.0
    %1295 = vmatprep.subr.mxu0 0.0
    %1296 = vmatpush1.xpose.msra.mxu0 0.0
    %1297 = vmatprep.subr.mxu0 0.0
    %1298 = vmatpush1.xpose.msra.mxu0 0.0
    %1299 = vmatprep.mubr.f32.mxu0 0.0
    %1300 = vmatmul.mubr.f32.gmra.mrb[0].mxu0 %v1231
    %v1301 = vpop.f32.mrb[0].mxu0
    %v1302 = vadd.f32 0.0, %v1301
    %v1303 = vpop.f32.mrb[0].mxu0
    %1304 = vdwg.mxu0
    %v1305 = vsel %vm330, %v1224, -inf
    %1306 = vmax.xlane.f32.xlu0 %v1305
    %v1307 = vpop.xlane.xlu0 %1306
    %v1308 = vsel %vm330, %v1302, -inf
    %1309 = vmax.xlane.f32.xlu0 %v1308
    %v1310 = vpop.xlane.xlu0 %1309
    %v1311 = vsub.f32 %v1224, %v1307
    %v1312 = vsub.f32 %v1302, %v1310
    %v1313 = vmul.f32 %v1311, 1.442695
    %v1314 = vpow.pop %v1313
    %v1315 = vmul.f32 %v1312, 1.442695
    %v1316 = vpow.pop %v1315
    %v1317 = vsel %vm330, %v1314, 0.0
    %1318 = vadd.xlane.f32.xlu0 %v1317
    %v1319 = vpop.xlane.xlu0 %1318
    %v1320 = vsel %vm330, %v1316, 0.0
    %1321 = vadd.xlane.f32.xlu0 %v1320
    %v1322 = vpop.xlane.xlu0 %1321
    %v1323 = vrcp.pop %v1319
    %v1324 = vrcp.pop %v1322
    %v1325 = vmul.f32 %v1314, %v1323
    %v1326 = vmul.f32 %v1316, %v1324
    %v1327 = vadd.f32 %v831, %v1325
    %v1328 = vadd.f32 %v832, %v1326
    %1329 = vrot.lane.b32.xlu0 %v316, 112
    %v1330 = vpop.permute.xlu0 %1329
    %v1333 = vsel %vm330, %v1325, 0
    %1335 = vmatprep.subr.mxu0 0.0
    %1336 = vmatpush1.msra.mxu0 %v1330
    %1337 = vmatprep.subr.mxu0 0.0
    %1338 = vmatpush1.msra.mxu0 0.0
    %1339 = vmatprep.subr.mxu0 0.0
    %1340 = vmatpush1.msra.mxu0 0.0
    %1341 = vmatprep.subr.mxu0 0.0
    %1342 = vmatpush1.msra.mxu0 0.0
    %1343 = vmatprep.subr.mxu0 0.0
    %1344 = vmatpush1.msra.mxu0 0.0
    %1345 = vmatprep.subr.mxu0 0.0
    %1346 = vmatpush1.msra.mxu0 0.0
    %1347 = vmatprep.subr.mxu0 0.0
    %1348 = vmatpush1.msra.mxu0 0.0
    %1349 = vmatprep.subr.mxu0 0.0
    %1350 = vmatpush1.msra.mxu0 0.0
    %1351 = vmatprep.subr.mxu0 0.0
    %1352 = vmatpush1.msra.mxu0 0.0
    %1353 = vmatprep.subr.mxu0 0.0
    %1354 = vmatpush1.msra.mxu0 0.0
    %1355 = vmatprep.subr.mxu0 0.0
    %1356 = vmatpush1.msra.mxu0 0.0
    %1357 = vmatprep.subr.mxu0 0.0
    %1358 = vmatpush1.msra.mxu0 0.0
    %1359 = vmatprep.subr.mxu0 0.0
    %1360 = vmatpush1.msra.mxu0 0.0
    %1361 = vmatprep.subr.mxu0 0.0
    %1362 = vmatpush1.msra.mxu0 0.0
    %1363 = vmatprep.subr.mxu0 0.0
    %1364 = vmatpush1.msra.mxu0 0.0
    %1365 = vmatprep.subr.mxu0 0.0
    %1366 = vmatpush1.msra.mxu0 0.0
    %1367 = vmatprep.subr.mxu0 0.0
    %1368 = vmatpush1.msra.mxu0 0.0
    %1369 = vmatprep.subr.mxu0 0.0
    %1370 = vmatpush1.msra.mxu0 0.0
    %1371 = vmatprep.subr.mxu0 0.0
    %1372 = vmatpush1.msra.mxu0 0.0
    %1373 = vmatprep.subr.mxu0 0.0
    %1374 = vmatpush1.msra.mxu0 0.0
    %1375 = vmatprep.subr.mxu0 0.0
    %1376 = vmatpush1.msra.mxu0 0.0
    %1377 = vmatprep.subr.mxu0 0.0
    %1378 = vmatpush1.msra.mxu0 0.0
    %1379 = vmatprep.subr.mxu0 0.0
    %1380 = vmatpush1.msra.mxu0 0.0
    %1381 = vmatprep.subr.mxu0 0.0
    %1382 = vmatpush1.msra.mxu0 0.0
    %1383 = vmatprep.subr.mxu0 0.0
    %1384 = vmatpush1.msra.mxu0 0.0
    %1385 = vmatprep.subr.mxu0 0.0
    %1386 = vmatpush1.msra.mxu0 0.0
    %1387 = vmatprep.subr.mxu0 0.0
    %1388 = vmatpush1.msra.mxu0 0.0
    %1389 = vmatprep.subr.mxu0 0.0
    %1390 = vmatpush1.msra.mxu0 0.0
    %1391 = vmatprep.subr.mxu0 0.0
    %1392 = vmatpush1.msra.mxu0 0.0
    %1393 = vmatprep.subr.mxu0 0.0
    %1394 = vmatpush1.msra.mxu0 0.0
    %1395 = vmatprep.subr.mxu0 0.0
    %1396 = vmatpush1.msra.mxu0 0.0
    %1397 = vmatprep.subr.mxu0 0.0
    %1398 = vmatpush1.msra.mxu0 0.0
    %1399 = vmatprep.mubr.f32.mxu0 0.0
    %1400 = vmatmul.mubr.f32.gmra.mrb[0].mxu0 %v1333
    %v1401 = vpop.f32.mrb[0].mxu0
    %v1402 = vadd.f32 0.0, %v1401
    %v1403 = vpop.f32.mrb[0].mxu0
    %1404 = vdwg.mxu0
    %1405 = vrot.lane.b32.xlu0 %v321, 112
    %v1406 = vpop.permute.xlu0 %1405
    %v1409 = vsel %vm330, %v1326, 0
    %1411 = vmatprep.subr.mxu0 0.0
    %1412 = vmatpush1.msra.mxu0 %v1406
    %1413 = vmatprep.subr.mxu0 0.0
    %1414 = vmatpush1.msra.mxu0 0.0
    %1415 = vmatprep.subr.mxu0 0.0
    %1416 = vmatpush1.msra.mxu0 0.0
    %1417 = vmatprep.subr.mxu0 0.0
    %1418 = vmatpush1.msra.mxu0 0.0
    %1419 = vmatprep.subr.mxu0 0.0
    %1420 = vmatpush1.msra.mxu0 0.0
    %1421 = vmatprep.subr.mxu0 0.0
    %1422 = vmatpush1.msra.mxu0 0.0
    %1423 = vmatprep.subr.mxu0 0.0
    %1424 = vmatpush1.msra.mxu0 0.0
    %1425 = vmatprep.subr.mxu0 0.0
    %1426 = vmatpush1.msra.mxu0 0.0
    %1427 = vmatprep.subr.mxu0 0.0
    %1428 = vmatpush1.msra.mxu0 0.0
    %1429 = vmatprep.subr.mxu0 0.0
    %1430 = vmatpush1.msra.mxu0 0.0
    %1431 = vmatprep.subr.mxu0 0.0
    %1432 = vmatpush1.msra.mxu0 0.0
    %1433 = vmatprep.subr.mxu0 0.0
    %1434 = vmatpush1.msra.mxu0 0.0
    %1435 = vmatprep.subr.mxu0 0.0
    %1436 = vmatpush1.msra.mxu0 0.0
    %1437 = vmatprep.subr.mxu0 0.0
    %1438 = vmatpush1.msra.mxu0 0.0
    %1439 = vmatprep.subr.mxu0 0.0
    %1440 = vmatpush1.msra.mxu0 0.0
    %1441 = vmatprep.subr.mxu0 0.0
    %1442 = vmatpush1.msra.mxu0 0.0
    %1443 = vmatprep.subr.mxu0 0.0
    %1444 = vmatpush1.msra.mxu0 0.0
    %1445 = vmatprep.subr.mxu0 0.0
    %1446 = vmatpush1.msra.mxu0 0.0
    %1447 = vmatprep.subr.mxu0 0.0
    %1448 = vmatpush1.msra.mxu0 0.0
    %1449 = vmatprep.subr.mxu0 0.0
    %1450 = vmatpush1.msra.mxu0 0.0
    %1451 = vmatprep.subr.mxu0 0.0
    %1452 = vmatpush1.msra.mxu0 0.0
    %1453 = vmatprep.subr.mxu0 0.0
    %1454 = vmatpush1.msra.mxu0 0.0
    %1455 = vmatprep.subr.mxu0 0.0
    %1456 = vmatpush1.msra.mxu0 0.0
    %1457 = vmatprep.subr.mxu0 0.0
    %1458 = vmatpush1.msra.mxu0 0.0
    %1459 = vmatprep.subr.mxu0 0.0
    %1460 = vmatpush1.msra.mxu0 0.0
    %1461 = vmatprep.subr.mxu0 0.0
    %1462 = vmatpush1.msra.mxu0 0.0
    %1463 = vmatprep.subr.mxu0 0.0
    %1464 = vmatpush1.msra.mxu0 0.0
    %1465 = vmatprep.subr.mxu0 0.0
    %1466 = vmatpush1.msra.mxu0 0.0
    %1467 = vmatprep.subr.mxu0 0.0
    %1468 = vmatpush1.msra.mxu0 0.0
    %1469 = vmatprep.subr.mxu0 0.0
    %1470 = vmatpush1.msra.mxu0 0.0
    %1471 = vmatprep.subr.mxu0 0.0
    %1472 = vmatpush1.msra.mxu0 0.0
    %1473 = vmatprep.subr.mxu0 0.0
    %1474 = vmatpush1.msra.mxu0 0.0
    %1475 = vmatprep.mubr.f32.mxu0 0.0
    %1476 = vmatmul.mubr.f32.gmra.mrb[0].mxu0 %v1409
    %v1477 = vpop.f32.mrb[0].mxu0
    %v1478 = vadd.f32 0.0, %v1477
    %v1479 = vpop.f32.mrb[0].mxu0
    %1480 = vdwg.mxu0
    %v1482 = vsel %vm330, %v1402, 0
    %v1485 = vsel %vm330, %v1478, 0
    %1487 = vmatprep.subr.mxu0 0.0
    %1488 = vmatpush1.msra.mxu0 %v328
    %1489 = vmatprep.subr.mxu0 0.0
    %1490 = vmatpush1.msra.mxu0 0.0
    %1491 = vmatprep.subr.mxu0 0.0
    %1492 = vmatpush1.msra.mxu0 0.0
    %1493 = vmatprep.subr.mxu0 0.0
    %1494 = vmatpush1.msra.mxu0 0.0
    %1495 = vmatprep.subr.mxu0 0.0
    %1496 = vmatpush1.msra.mxu0 0.0
    %1497 = vmatprep.subr.mxu0 0.0
    %1498 = vmatpush1.msra.mxu0 0.0
    %1499 = vmatprep.subr.mxu0 0.0
    %1500 = vmatpush1.msra.mxu0 0.0
    %1501 = vmatprep.subr.mxu0 0.0
    %1502 = vmatpush1.msra.mxu0 0.0
    %1503 = vmatprep.subr.mxu0 0.0
    %1504 = vmatpush1.msra.mxu0 0.0
    %1505 = vmatprep.subr.mxu0 0.0
    %1506 = vmatpush1.msra.mxu0 0.0
    %1507 = vmatprep.subr.mxu0 0.0
    %1508 = vmatpush1.msra.mxu0 0.0
    %1509 = vmatprep.subr.mxu0 0.0
    %1510 = vmatpush1.msra.mxu0 0.0
    %1511 = vmatprep.subr.mxu0 0.0
    %1512 = vmatpush1.msra.mxu0 0.0
    %1513 = vmatprep.subr.mxu0 0.0
    %1514 = vmatpush1.msra.mxu0 0.0
    %1515 = vmatprep.subr.mxu0 0.0
    %1516 = vmatpush1.msra.mxu0 0.0
    %1517 = vmatprep.subr.mxu0 0.0
    %1518 = vmatpush1.msra.mxu0 0.0
    %1519 = vmatprep.subr.mxu0 0.0
    %1520 = vmatpush1.msra.mxu0 0.0
    %1521 = vmatprep.subr.mxu0 0.0
    %1522 = vmatpush1.msra.mxu0 0.0
    %1523 = vmatprep.subr.mxu0 0.0
    %1524 = vmatpush1.msra.mxu0 0.0
    %1525 = vmatprep.subr.mxu0 0.0
    %1526 = vmatpush1.msra.mxu0 0.0
    %1527 = vmatprep.subr.mxu0 0.0
    %1528 = vmatpush1.msra.mxu0 0.0
    %1529 = vmatprep.subr.mxu0 0.0
    %1530 = vmatpush1.msra.mxu0 0.0
    %1531 = vmatprep.subr.mxu0 0.0
    %1532 = vmatpush1.msra.mxu0 0.0
    %1533 = vmatprep.subr.mxu0 0.0
    %1534 = vmatpush1.msra.mxu0 0.0
    %1535 = vmatprep.subr.mxu0 0.0
    %1536 = vmatpush1.msra.mxu0 0.0
    %1537 = vmatprep.subr.mxu0 0.0
    %1538 = vmatpush1.msra.mxu0 0.0
    %1539 = vmatprep.subr.mxu0 0.0
    %1540 = vmatpush1.msra.mxu0 0.0
    %1541 = vmatprep.subr.mxu0 0.0
    %1542 = vmatpush1.msra.mxu0 0.0
    %1543 = vmatprep.subr.mxu0 0.0
    %1544 = vmatpush1.msra.mxu0 0.0
    %1545 = vmatprep.subr.mxu0 0.0
    %1546 = vmatpush1.msra.mxu0 0.0
    %1547 = vmatprep.subr.mxu0 0.0
    %1548 = vmatpush1.msra.mxu0 0.0
    %1549 = vmatprep.subr.mxu0 0.0
    %1550 = vmatpush1.msra.mxu0 0.0
    %1551 = vmatprep.mubr.f32.mxu0 0.0
    %1552 = vmatmul.mubr.f32.gmra.mrb[0].mxu0 %v1482
    %v1553 = vpop.f32.mrb[0].mxu0
    %v1554 = vadd.f32 0.0, %v1553
    %v1555 = vpop.f32.mrb[0].mxu0
    %1556 = vmatprep.mubr.f32.mxu0 0.0
    %1557 = vmatmul.mubr.f32.gmra.mrb[0].mxu0 %v1485
    %v1558 = vpop.f32.mrb[0].mxu0
    %v1559 = vadd.f32 0.0, %v1558
    %v1560 = vpop.f32.mrb[0].mxu0
    %1561 = vdwg.mxu0
    %v1562 = vadd.f32 %v1141, %v1554
    %v1563 = vadd.f32 %v1146, %v1559
    %1564 = vrot.lane.b32.xlu0 %v324, 104
    %v1565 = vpop.permute.xlu0 %1564
    %1566 = vrot.lane.b32.xlu0 %v222, 104
    %v1567 = vpop.permute.xlu0 %1566
    %v1568 = vsel %vm330, %v1565, 0
    %v1570 = vsel %vm330, %v1567, 0
    %1572 = vmatprep.subr.mxu0 0.0
    %1573 = vmatpush1.xpose.msra.mxu0 %v1570
    %1574 = vmatprep.subr.mxu0 0.0
    %1575 = vmatpush1.xpose.msra.mxu0 0.0
    %1576 = vmatprep.subr.mxu0 0.0
    %1577 = vmatpush1.xpose.msra.mxu0 0.0
    %1578 = vmatprep.subr.mxu0 0.0
    %1579 = vmatpush1.xpose.msra.mxu0 0.0
    %1580 = vmatprep.subr.mxu0 0.0
    %1581 = vmatpush1.xpose.msra.mxu0 0.0
    %1582 = vmatprep.subr.mxu0 0.0
    %1583 = vmatpush1.xpose.msra.mxu0 0.0
    %1584 = vmatprep.subr.mxu0 0.0
    %1585 = vmatpush1.xpose.msra.mxu0 0.0
    %1586 = vmatprep.subr.mxu0 0.0
    %1587 = vmatpush1.xpose.msra.mxu0 0.0
    %1588 = vmatprep.subr.mxu0 0.0
    %1589 = vmatpush1.xpose.msra.mxu0 0.0
    %1590 = vmatprep.subr.mxu0 0.0
    %1591 = vmatpush1.xpose.msra.mxu0 0.0
    %1592 = vmatprep.subr.mxu0 0.0
    %1593 = vmatpush1.xpose.msra.mxu0 0.0
    %1594 = vmatprep.subr.mxu0 0.0
    %1595 = vmatpush1.xpose.msra.mxu0 0.0
    %1596 = vmatprep.subr.mxu0 0.0
    %1597 = vmatpush1.xpose.msra.mxu0 0.0
    %1598 = vmatprep.subr.mxu0 0.0
    %1599 = vmatpush1.xpose.msra.mxu0 0.0
    %1600 = vmatprep.subr.mxu0 0.0
    %1601 = vmatpush1.xpose.msra.mxu0 0.0
    %1602 = vmatprep.subr.mxu0 0.0
    %1603 = vmatpush1.xpose.msra.mxu0 0.0
    %1604 = vmatprep.subr.mxu0 0.0
    %1605 = vmatpush1.xpose.msra.mxu0 0.0
    %1606 = vmatprep.subr.mxu0 0.0
    %1607 = vmatpush1.xpose.msra.mxu0 0.0
    %1608 = vmatprep.subr.mxu0 0.0
    %1609 = vmatpush1.xpose.msra.mxu0 0.0
    %1610 = vmatprep.subr.mxu0 0.0
    %1611 = vmatpush1.xpose.msra.mxu0 0.0
    %1612 = vmatprep.subr.mxu0 0.0
    %1613 = vmatpush1.xpose.msra.mxu0 0.0
    %1614 = vmatprep.subr.mxu0 0.0
    %1615 = vmatpush1.xpose.msra.mxu0 0.0
    %1616 = vmatprep.subr.mxu0 0.0
    %1617 = vmatpush1.xpose.msra.mxu0 0.0
    %1618 = vmatprep.subr.mxu0 0.0
    %1619 = vmatpush1.xpose.msra.mxu0 0.0
    %1620 = vmatprep.subr.mxu0 0.0
    %1621 = vmatpush1.xpose.msra.mxu0 0.0
    %1622 = vmatprep.subr.mxu0 0.0
    %1623 = vmatpush1.xpose.msra.mxu0 0.0
    %1624 = vmatprep.subr.mxu0 0.0
    %1625 = vmatpush1.xpose.msra.mxu0 0.0
    %1626 = vmatprep.subr.mxu0 0.0
    %1627 = vmatpush1.xpose.msra.mxu0 0.0
    %1628 = vmatprep.subr.mxu0 0.0
    %1629 = vmatpush1.xpose.msra.mxu0 0.0
    %1630 = vmatprep.subr.mxu0 0.0
    %1631 = vmatpush1.xpose.msra.mxu0 0.0
    %1632 = vmatprep.subr.mxu0 0.0
    %1633 = vmatpush1.xpose.msra.mxu0 0.0
    %1634 = vmatprep.subr.mxu0 0.0
    %1635 = vmatpush1.xpose.msra.mxu0 0.0
    %1636 = vmatprep.mubr.f32.mxu0 0.0
    %1637 = vmatmul.mubr.f32.gmra.mrb[0].mxu0 %v1568
    %v1638 = vpop.f32.mrb[0].mxu0
    %v1639 = vadd.f32 0.0, %v1638
    %v1640 = vpop.f32.mrb[0].mxu0
    %1641 = vdwg.mxu0
    %1642 = vrot.lane.b32.xlu0 %v325, 104
    %v1643 = vpop.permute.xlu0 %1642
    %1644 = vrot.lane.b32.xlu0 %v227, 104
    %v1645 = vpop.permute.xlu0 %1644
    %v1646 = vsel %vm330, %v1643, 0
    %v1648 = vsel %vm330, %v1645, 0
    %1650 = vmatprep.subr.mxu0 0.0
    %1651 = vmatpush1.xpose.msra.mxu0 %v1648
    %1652 = vmatprep.subr.mxu0 0.0
    %1653 = vmatpush1.xpose.msra.mxu0 0.0
    %1654 = vmatprep.subr.mxu0 0.0
    %1655 = vmatpush1.xpose.msra.mxu0 0.0
    %1656 = vmatprep.subr.mxu0 0.0
    %1657 = vmatpush1.xpose.msra.mxu0 0.0
    %1658 = vmatprep.subr.mxu0 0.0
    %1659 = vmatpush1.xpose.msra.mxu0 0.0
    %1660 = vmatprep.subr.mxu0 0.0
    %1661 = vmatpush1.xpose.msra.mxu0 0.0
    %1662 = vmatprep.subr.mxu0 0.0
    %1663 = vmatpush1.xpose.msra.mxu0 0.0
    %1664 = vmatprep.subr.mxu0 0.0
    %1665 = vmatpush1.xpose.msra.mxu0 0.0
    %1666 = vmatprep.subr.mxu0 0.0
    %1667 = vmatpush1.xpose.msra.mxu0 0.0
    %1668 = vmatprep.subr.mxu0 0.0
    %1669 = vmatpush1.xpose.msra.mxu0 0.0
    %1670 = vmatprep.subr.mxu0 0.0
    %1671 = vmatpush1.xpose.msra.mxu0 0.0
    %1672 = vmatprep.subr.mxu0 0.0
    %1673 = vmatpush1.xpose.msra.mxu0 0.0
    %1674 = vmatprep.subr.mxu0 0.0
    %1675 = vmatpush1.xpose.msra.mxu0 0.0
    %1676 = vmatprep.subr.mxu0 0.0
    %1677 = vmatpush1.xpose.msra.mxu0 0.0
    %1678 = vmatprep.subr.mxu0 0.0
    %1679 = vmatpush1.xpose.msra.mxu0 0.0
    %1680 = vmatprep.subr.mxu0 0.0
    %1681 = vmatpush1.xpose.msra.mxu0 0.0
    %1682 = vmatprep.subr.mxu0 0.0
    %1683 = vmatpush1.xpose.msra.mxu0 0.0
    %1684 = vmatprep.subr.mxu0 0.0
    %1685 = vmatpush1.xpose.msra.mxu0 0.0
    %1686 = vmatprep.subr.mxu0 0.0
    %1687 = vmatpush1.xpose.msra.mxu0 0.0
    %1688 = vmatprep.subr.mxu0 0.0
    %1689 = vmatpush1.xpose.msra.mxu0 0.0
    %1690 = vmatprep.subr.mxu0 0.0
    %1691 = vmatpush1.xpose.msra.mxu0 0.0
    %1692 = vmatprep.subr.mxu0 0.0
    %1693 = vmatpush1.xpose.msra.mxu0 0.0
    %1694 = vmatprep.subr.mxu0 0.0
    %1695 = vmatpush1.xpose.msra.mxu0 0.0
    %1696 = vmatprep.subr.mxu0 0.0
    %1697 = vmatpush1.xpose.msra.mxu0 0.0
    %1698 = vmatprep.subr.mxu0 0.0
    %1699 = vmatpush1.xpose.msra.mxu0 0.0
    %1700 = vmatprep.subr.mxu0 0.0
    %1701 = vmatpush1.xpose.msra.mxu0 0.0
    %1702 = vmatprep.subr.mxu0 0.0
    %1703 = vmatpush1.xpose.msra.mxu0 0.0
    %1704 = vmatprep.subr.mxu0 0.0
    %1705 = vmatpush1.xpose.msra.mxu0 0.0
    %1706 = vmatprep.subr.mxu0 0.0
    %1707 = vmatpush1.xpose.msra.mxu0 0.0
    %1708 = vmatprep.subr.mxu0 0.0
    %1709 = vmatpush1.xpose.msra.mxu0 0.0
    %1710 = vmatprep.subr.mxu0 0.0
    %1711 = vmatpush1.xpose.msra.mxu0 0.0
    %1712 = vmatprep.subr.mxu0 0.0
    %1713 = vmatpush1.xpose.msra.mxu0 0.0
    %1714 = vmatprep.mubr.f32.mxu0 0.0
    %1715 = vmatmul.mubr.f32.gmra.mrb[0].mxu0 %v1646
    %v1716 = vpop.f32.mrb[0].mxu0
    %v1717 = vadd.f32 0.0, %v1716
    %v1718 = vpop.f32.mrb[0].mxu0
    %1719 = vdwg.mxu0
    %v1720 = vsel %vm330, %v1639, -inf
    %1721 = vmax.xlane.f32.xlu0 %v1720
    %v1722 = vpop.xlane.xlu0 %1721
    %v1723 = vsel %vm330, %v1717, -inf
    %1724 = vmax.xlane.f32.xlu0 %v1723
    %v1725 = vpop.xlane.xlu0 %1724
    %v1726 = vsub.f32 %v1639, %v1722
    %v1727 = vsub.f32 %v1717, %v1725
    %v1728 = vmul.f32 %v1726, 1.442695
    %v1729 = vpow.pop %v1728
    %v1730 = vmul.f32 %v1727, 1.442695
    %v1731 = vpow.pop %v1730
    %v1732 = vsel %vm330, %v1729, 0.0
    %1733 = vadd.xlane.f32.xlu0 %v1732
    %v1734 = vpop.xlane.xlu0 %1733
    %v1735 = vsel %vm330, %v1731, 0.0
    %1736 = vadd.xlane.f32.xlu0 %v1735
    %v1737 = vpop.xlane.xlu0 %1736
    %v1738 = vrcp.pop %v1734
    %v1739 = vrcp.pop %v1737
    %v1740 = vmul.f32 %v1729, %v1738
    %v1741 = vmul.f32 %v1731, %v1739
    %v1742 = vadd.f32 %v1327, %v1740
    %v1743 = vadd.f32 %v1328, %v1741
    %1744 = vrot.lane.b32.xlu0 %v316, 104
    %v1745 = vpop.permute.xlu0 %1744
    %v1748 = vsel %vm330, %v1740, 0
    %1750 = vmatprep.subr.mxu0 0.0
    %1751 = vmatpush1.msra.mxu0 %v1745
    %1752 = vmatprep.subr.mxu0 0.0
    %1753 = vmatpush1.msra.mxu0 0.0
    %1754 = vmatprep.subr.mxu0 0.0
    %1755 = vmatpush1.msra.mxu0 0.0
    %1756 = vmatprep.subr.mxu0 0.0
    %1757 = vmatpush1.msra.mxu0 0.0
    %1758 = vmatprep.subr.mxu0 0.0
    %1759 = vmatpush1.msra.mxu0 0.0
    %1760 = vmatprep.subr.mxu0 0.0
    %1761 = vmatpush1.msra.mxu0 0.0
    %1762 = vmatprep.subr.mxu0 0.0
    %1763 = vmatpush1.msra.mxu0 0.0
    %1764 = vmatprep.subr.mxu0 0.0
    %1765 = vmatpush1.msra.mxu0 0.0
    %1766 = vmatprep.subr.mxu0 0.0
    %1767 = vmatpush1.msra.mxu0 0.0
    %1768 = vmatprep.subr.mxu0 0.0
    %1769 = vmatpush1.msra.mxu0 0.0
    %1770 = vmatprep.subr.mxu0 0.0
    %1771 = vmatpush1.msra.mxu0 0.0
    %1772 = vmatprep.subr.mxu0 0.0
    %1773 = vmatpush1.msra.mxu0 0.0
    %1774 = vmatprep.subr.mxu0 0.0
    %1775 = vmatpush1.msra.mxu0 0.0
    %1776 = vmatprep.subr.mxu0 0.0
    %1777 = vmatpush1.msra.mxu0 0.0
    %1778 = vmatprep.subr.mxu0 0.0
    %1779 = vmatpush1.msra.mxu0 0.0
    %1780 = vmatprep.subr.mxu0 0.0
    %1781 = vmatpush1.msra.mxu0 0.0
    %1782 = vmatprep.subr.mxu0 0.0
    %1783 = vmatpush1.msra.mxu0 0.0
    %1784 = vmatprep.subr.mxu0 0.0
    %1785 = vmatpush1.msra.mxu0 0.0
    %1786 = vmatprep.subr.mxu0 0.0
    %1787 = vmatpush1.msra.mxu0 0.0
    %1788 = vmatprep.subr.mxu0 0.0
    %1789 = vmatpush1.msra.mxu0 0.0
    %1790 = vmatprep.subr.mxu0 0.0
    %1791 = vmatpush1.msra.mxu0 0.0
    %1792 = vmatprep.subr.mxu0 0.0
    %1793 = vmatpush1.msra.mxu0 0.0
    %1794 = vmatprep.subr.mxu0 0.0
    %1795 = vmatpush1.msra.mxu0 0.0
    %1796 = vmatprep.subr.mxu0 0.0
    %1797 = vmatpush1.msra.mxu0 0.0
    %1798 = vmatprep.subr.mxu0 0.0
    %1799 = vmatpush1.msra.mxu0 0.0
    %1800 = vmatprep.subr.mxu0 0.0
    %1801 = vmatpush1.msra.mxu0 0.0
    %1802 = vmatprep.subr.mxu0 0.0
    %1803 = vmatpush1.msra.mxu0 0.0
    %1804 = vmatprep.subr.mxu0 0.0
    %1805 = vmatpush1.msra.mxu0 0.0
    %1806 = vmatprep.subr.mxu0 0.0
    %1807 = vmatpush1.msra.mxu0 0.0
    %1808 = vmatprep.subr.mxu0 0.0
    %1809 = vmatpush1.msra.mxu0 0.0
    %1810 = vmatprep.subr.mxu0 0.0
    %1811 = vmatpush1.msra.mxu0 0.0
    %1812 = vmatprep.subr.mxu0 0.0
    %1813 = vmatpush1.msra.mxu0 0.0
    %1814 = vmatprep.mubr.f32.mxu0 0.0
    %1815 = vmatmul.mubr.f32.gmra.mrb[0].mxu0 %v1748
    %v1816 = vpop.f32.mrb[0].mxu0
    %v1817 = vadd.f32 0.0, %v1816
    %v1818 = vpop.f32.mrb[0].mxu0
    %1819 = vdwg.mxu0
    %1820 = vrot.lane.b32.xlu0 %v321, 104
    %v1821 = vpop.permute.xlu0 %1820
    %v1824 = vsel %vm330, %v1741, 0
    %1826 = vmatprep.subr.mxu0 0.0
    %1827 = vmatpush1.msra.mxu0 %v1821
    %1828 = vmatprep.subr.mxu0 0.0
    %1829 = vmatpush1.msra.mxu0 0.0
    %1830 = vmatprep.subr.mxu0 0.0
    %1831 = vmatpush1.msra.mxu0 0.0
    %1832 = vmatprep.subr.mxu0 0.0
    %1833 = vmatpush1.msra.mxu0 0.0
    %1834 = vmatprep.subr.mxu0 0.0
    %1835 = vmatpush1.msra.mxu0 0.0
    %1836 = vmatprep.subr.mxu0 0.0
    %1837 = vmatpush1.msra.mxu0 0.0
    %1838 = vmatprep.subr.mxu0 0.0
    %1839 = vmatpush1.msra.mxu0 0.0
    %1840 = vmatprep.subr.mxu0 0.0
    %1841 = vmatpush1.msra.mxu0 0.0
    %1842 = vmatprep.subr.mxu0 0.0
    %1843 = vmatpush1.msra.mxu0 0.0
    %1844 = vmatprep.subr.mxu0 0.0
    %1845 = vmatpush1.msra.mxu0 0.0
    %1846 = vmatprep.subr.mxu0 0.0
    %1847 = vmatpush1.msra.mxu0 0.0
    %1848 = vmatprep.subr.mxu0 0.0
    %1849 = vmatpush1.msra.mxu0 0.0
    %1850 = vmatprep.subr.mxu0 0.0
    %1851 = vmatpush1.msra.mxu0 0.0
    %1852 = vmatprep.subr.mxu0 0.0
    %1853 = vmatpush1.msra.mxu0 0.0
    %1854 = vmatprep.subr.mxu0 0.0
    %1855 = vmatpush1.msra.mxu0 0.0
    %1856 = vmatprep.subr.mxu0 0.0
    %1857 = vmatpush1.msra.mxu0 0.0
    %1858 = vmatprep.subr.mxu0 0.0
    %1859 = vmatpush1.msra.mxu0 0.0
    %1860 = vmatprep.subr.mxu0 0.0
    %1861 = vmatpush1.msra.mxu0 0.0
    %1862 = vmatprep.subr.mxu0 0.0
    %1863 = vmatpush1.msra.mxu0 0.0
    %1864 = vmatprep.subr.mxu0 0.0
    %1865 = vmatpush1.msra.mxu0 0.0
    %1866 = vmatprep.subr.mxu0 0.0
    %1867 = vmatpush1.msra.mxu0 0.0
    %1868 = vmatprep.subr.mxu0 0.0
    %1869 = vmatpush1.msra.mxu0 0.0
    %1870 = vmatprep.subr.mxu0 0.0
    %1871 = vmatpush1.msra.mxu0 0.0
    %1872 = vmatprep.subr.mxu0 0.0
    %1873 = vmatpush1.msra.mxu0 0.0
    %1874 = vmatprep.subr.mxu0 0.0
    %1875 = vmatpush1.msra.mxu0 0.0
    %1876 = vmatprep.subr.mxu0 0.0
    %1877 = vmatpush1.msra.mxu0 0.0
    %1878 = vmatprep.subr.mxu0 0.0
    %1879 = vmatpush1.msra.mxu0 0.0
    %1880 = vmatprep.subr.mxu0 0.0
    %1881 = vmatpush1.msra.mxu0 0.0
    %1882 = vmatprep.subr.mxu0 0.0
    %1883 = vmatpush1.msra.mxu0 0.0
    %1884 = vmatprep.subr.mxu0 0.0
    %1885 = vmatpush1.msra.mxu0 0.0
    %1886 = vmatprep.subr.mxu0 0.0
    %1887 = vmatpush1.msra.mxu0 0.0
    %1888 = vmatprep.subr.mxu0 0.0
    %1889 = vmatpush1.msra.mxu0 0.0
    %1890 = vmatprep.mubr.f32.mxu0 0.0
    %1891 = vmatmul.mubr.f32.gmra.mrb[0].mxu0 %v1824
    %v1892 = vpop.f32.mrb[0].mxu0
    %v1893 = vadd.f32 0.0, %v1892
    %v1894 = vpop.f32.mrb[0].mxu0
    %1895 = vdwg.mxu0
    %v1897 = vsel %vm330, %v1817, 0
    %v1900 = vsel %vm330, %v1893, 0
    %1902 = vmatprep.subr.mxu0 0.0
    %1903 = vmatpush1.msra.mxu0 %v329
    %1904 = vmatprep.subr.mxu0 0.0
    %1905 = vmatpush1.msra.mxu0 0.0
    %1906 = vmatprep.subr.mxu0 0.0
    %1907 = vmatpush1.msra.mxu0 0.0
    %1908 = vmatprep.subr.mxu0 0.0
    %1909 = vmatpush1.msra.mxu0 0.0
    %1910 = vmatprep.subr.mxu0 0.0
    %1911 = vmatpush1.msra.mxu0 0.0
    %1912 = vmatprep.subr.mxu0 0.0
    %1913 = vmatpush1.msra.mxu0 0.0
    %1914 = vmatprep.subr.mxu0 0.0
    %1915 = vmatpush1.msra.mxu0 0.0
    %1916 = vmatprep.subr.mxu0 0.0
    %1917 = vmatpush1.msra.mxu0 0.0
    %1918 = vmatprep.subr.mxu0 0.0
    %1919 = vmatpush1.msra.mxu0 0.0
    %1920 = vmatprep.subr.mxu0 0.0
    %1921 = vmatpush1.msra.mxu0 0.0
    %1922 = vmatprep.subr.mxu0 0.0
    %1923 = vmatpush1.msra.mxu0 0.0
    %1924 = vmatprep.subr.mxu0 0.0
    %1925 = vmatpush1.msra.mxu0 0.0
    %1926 = vmatprep.subr.mxu0 0.0
    %1927 = vmatpush1.msra.mxu0 0.0
    %1928 = vmatprep.subr.mxu0 0.0
    %1929 = vmatpush1.msra.mxu0 0.0
    %1930 = vmatprep.subr.mxu0 0.0
    %1931 = vmatpush1.msra.mxu0 0.0
    %1932 = vmatprep.subr.mxu0 0.0
    %1933 = vmatpush1.msra.mxu0 0.0
    %1934 = vmatprep.subr.mxu0 0.0
    %1935 = vmatpush1.msra.mxu0 0.0
    %1936 = vmatprep.subr.mxu0 0.0
    %1937 = vmatpush1.msra.mxu0 0.0
    %1938 = vmatprep.subr.mxu0 0.0
    %1939 = vmatpush1.msra.mxu0 0.0
    %1940 = vmatprep.subr.mxu0 0.0
    %1941 = vmatpush1.msra.mxu0 0.0
    %1942 = vmatprep.subr.mxu0 0.0
    %1943 = vmatpush1.msra.mxu0 0.0
    %1944 = vmatprep.subr.mxu0 0.0
    %1945 = vmatpush1.msra.mxu0 0.0
    %1946 = vmatprep.subr.mxu0 0.0
    %1947 = vmatpush1.msra.mxu0 0.0
    %1948 = vmatprep.subr.mxu0 0.0
    %1949 = vmatpush1.msra.mxu0 0.0
    %1950 = vmatprep.subr.mxu0 0.0
    %1951 = vmatpush1.msra.mxu0 0.0
    %1952 = vmatprep.subr.mxu0 0.0
    %1953 = vmatpush1.msra.mxu0 0.0
    %1954 = vmatprep.subr.mxu0 0.0
    %1955 = vmatpush1.msra.mxu0 0.0
    %1956 = vmatprep.subr.mxu0 0.0
    %1957 = vmatpush1.msra.mxu0 0.0
    %1958 = vmatprep.subr.mxu0 0.0
    %1959 = vmatpush1.msra.mxu0 0.0
    %1960 = vmatprep.subr.mxu0 0.0
    %1961 = vmatpush1.msra.mxu0 0.0
    %1962 = vmatprep.subr.mxu0 0.0
    %1963 = vmatpush1.msra.mxu0 0.0
    %1964 = vmatprep.subr.mxu0 0.0
    %1965 = vmatpush1.msra.mxu0 0.0
    %1966 = vmatprep.mubr.f32.mxu0 0.0
    %1967 = vmatmul.mubr.f32.gmra.mrb[0].mxu0 %v1897
    %v1968 = vpop.f32.mrb[0].mxu0
    %v1969 = vadd.f32 0.0, %v1968
    %v1970 = vpop.f32.mrb[0].mxu0
    %1971 = vmatprep.mubr.f32.mxu0 0.0
    %1972 = vmatmul.mubr.f32.gmra.mrb[0].mxu0 %v1900
    %v1973 = vpop.f32.mrb[0].mxu0
    %v1974 = vadd.f32 0.0, %v1973
    %v1975 = vpop.f32.mrb[0].mxu0
    %1976 = vdwg.mxu0
    %v1977 = vadd.f32 %v1562, %v1969
    %v1978 = vadd.f32 %v1563, %v1974
    %v1979 = vld [vmem:[%s10] sm:$0x1]
    %v1981 = vlaneseq
    %v1982 = vshrl.u32 %v1981, 7
    %v1983 = vsub.s32 0, %v1982
    %v1984 = vrot.slane %v1979, %v1983
    %v1986 = vadd.f32 %v1977, %v1984
    %v1987 = vadd.f32 %v1978, %v1984
    %1988 = vst.msk [vmem:[%s11] sm:$0xff] %vm54, %v1986
    %1989 = vst.msk [vmem:[%s11 + $0x8] sm:$0xff] %vm54, %v1987
    %v1990 = vmul.f32 %v1742, 0.25
    %v1991 = vmul.f32 %v1743, 0.25
    %1992 = vst.msk [vmem:[#allocation2] sm:$0xff] %vm330, %v1990
    %1993 = vst.msk [vmem:[#allocation2 + $0x8] sm:$0xff] %vm330, %v1991
    // Predicated region
    $region46: #{multihead_attention.1} parent=1 // pred_check
      _
    $region47: #{multihead_attention.1} parent=1 // pred_check_branch
      %1995 = sbr.rel (0) target = $region49
    $region48: #{multihead_attention.1} parent=1 // pred_region
      _
    $region49: #{multihead_attention.1} parent=1 // pred_fallthru
      _
    // Predicated region
    $region50: #{multihead_attention.1} parent=1 // pred_check
      _
    $region51: #{multihead_attention.1} parent=1 // pred_check_branch
      %1997 = sbr.rel (0) target = $region53
    $region52: #{multihead_attention.1} parent=1 // pred_region
      %s1999 = ssub.s32 256, 256
      %2000 = vsyncadd [#allocation3], %s1999
      %s2001 = sshll.u32 [#allocation2], 4
      %s2002 = int_to_ptr.vmem [resolvable:$true] %s2001
      %2007 = dma.vmem_to_hbm [thread:$0]  %s2002, 256, %s12, [#allocation3], 128, 128, 8
    $region53: #{multihead_attention.1} parent=1 // pred_fallthru
      _
    // Predicated region
    $region54: #{multihead_attention.1} parent=1 // pred_check
      _
    $region55: #{multihead_attention.1} parent=1 // pred_check_branch
      %2009 = sbr.rel (0) target = $region57
    $region56: #{multihead_attention.1} parent=1 // pred_region
      _
    $region57: #{multihead_attention.1} parent=1 // pred_fallthru
      _
    // Predicated region
    $region58: #{multihead_attention.1} parent=1 // pred_check
      _
    $region59: #{multihead_attention.1} parent=1 // pred_check_branch
      %2011 = sbr.rel (0) target = $region61
    $region60: #{multihead_attention.1} parent=1 // pred_region
      %2012 = dma.done [#allocation3], 256
    $region61: #{multihead_attention.1} parent=1 // pred_fallthru
      _
    %2013 = vsyncpa [#allocation3], 1

</llo_original>
